<compile_context>
chip_gen: v7x
topology: tpu7x:2x2x1
jax: 0.10.0
libtpu: 0.0.40
codegen_flags: <defaults>
</compile_context>

<pallas_src>
import functools

import jax
import jax.numpy as jnp
from jax.experimental import pallas as pl
from jax.experimental.pallas import tpu as pltpu


# ----------------------------------------------------------------------------
# Small helpers
# ----------------------------------------------------------------------------
def _round_up(x, m):
    return (x + m - 1) // m * m


def _vmem_capacity_bytes():
    """Generation-aware VMEM capacity; conservative (v7x) fallback."""
    try:
        info = pltpu.get_tpu_info()
        cap = getattr(info, "vmem_capacity_bytes", None)
        if cap:
            return int(cap)
    except Exception:
        pass
    return 64 * 1024 * 1024


def _resident_spec(block_shape, index_map):
    """Grid-invariant operand: single-buffer it to save VMEM (weights/biases)."""
    try:
        return pl.BlockSpec(block_shape, index_map, pipeline_mode=pl.Buffered(1))
    except Exception:  # older jax without pipeline_mode / Buffered
        return pl.BlockSpec(block_shape, index_map)


def _a_bf16(a_int8):
    # int8 -> f32 -> bf16: exact for small integer edge multiplicities.
    return a_int8.astype(jnp.float32).astype(jnp.bfloat16)


# ----------------------------------------------------------------------------
# Kernels
# ----------------------------------------------------------------------------
def _mlp_relu(h_f32, w1_ref, b1_ref, w2_ref, b2_ref):
    """relu( (relu(h @ W1 + b1)) @ W2 + b2 ) with BN folded into W2/b2."""
    h = jnp.dot(h_f32.astype(jnp.bfloat16), w1_ref[...],
                preferred_element_type=jnp.float32) + b1_ref[...]
    h = jnp.maximum(h, 0.0)
    h = jnp.dot(h.astype(jnp.bfloat16), w2_ref[...],
                preferred_element_type=jnp.float32) + b2_ref[...]
    return jnp.maximum(h, 0.0)  # outer F.relu(conv(...)) fused in


def _log_softmax(z):
    z = z - jnp.max(z, axis=-1, keepdims=True)
    return z - jnp.log(jnp.sum(jnp.exp(z), axis=-1, keepdims=True))


def _gin_fused_kernel(a_ref, x_ref,
                      w11_ref, b11_ref, w12_ref, b12_ref,
                      w21_ref, b21_ref, w22_ref, b22_ref,
                      wl_ref, bl_ref, out_ref):
    """Whole network in one call: A resident, h1 never leaves VMEM."""
    a = _a_bf16(a_ref[...])                                   # (N_pad, N_pad)
    # Layer 1: (A + I) @ x  (self term folded into A's diagonal).
    h = jnp.dot(a, x_ref[...], preferred_element_type=jnp.float32)
    h = _mlp_relu(h, w11_ref, b11_ref, w12_ref, b12_ref)
    # Layer 2.
    h = jnp.dot(a, h.astype(jnp.bfloat16), preferred_element_type=jnp.float32)
    h = _mlp_relu(h, w21_ref, b21_ref, w22_ref, b22_ref)
    # Final Linear + log_softmax (padded logit lanes carry a -1e30 bias).
    z = jnp.dot(h.astype(jnp.bfloat16), wl_ref[...],
                preferred_element_type=jnp.float32) + bl_ref[...]
    out_ref[...] = _log_softmax(z)


def _gin_layer_kernel(a_ref, x_ref, w1_ref, b1_ref, w2_ref, b2_ref,
                      out_ref, acc_ref):
    """K-tiled GINConv: accumulate A_tile @ x_tile, MLP epilogue at last K."""
    k = pl.program_id(1)

    @pl.when(k == 0)
    def _():
        acc_ref[...] = jnp.zeros_like(acc_ref)

    acc_ref[...] += jnp.dot(_a_bf16(a_ref[...]), x_ref[...],
                            preferred_element_type=jnp.float32)

    @pl.when(k == pl.num_programs(1) - 1)
    def _():
        h = _mlp_relu(acc_ref[...], w1_ref, b1_ref, w2_ref, b2_ref)
        out_ref[...] = h.astype(out_ref.dtype)


def _gin_final_kernel(a_ref, h_ref, w1_ref, b1_ref, w2_ref, b2_ref,
                      wl_ref, bl_ref, out_ref, acc_ref):
    """K-tiled GINConv 2 + final Linear + log_softmax."""
    k = pl.program_id(1)

    @pl.when(k == 0)
    def _():
        acc_ref[...] = jnp.zeros_like(acc_ref)

    acc_ref[...] += jnp.dot(_a_bf16(a_ref[...]), h_ref[...],
                            preferred_element_type=jnp.float32)

    @pl.when(k == pl.num_programs(1) - 1)
    def _():
        h = _mlp_relu(acc_ref[...], w1_ref, b1_ref, w2_ref, b2_ref)
        z = jnp.dot(h.astype(jnp.bfloat16), wl_ref[...],
                    preferred_element_type=jnp.float32) + bl_ref[...]
        out_ref[...] = _log_softmax(z)


# ----------------------------------------------------------------------------
# VMEM accounting / tile picking
# ----------------------------------------------------------------------------
def _weight_bytes(cin_pad, hid_pad, out_pad):
    return (2 * (cin_pad * hid_pad + 3 * hid_pad * hid_pad + hid_pad * out_pad)
            + 4 * (4 * hid_pad + out_pad))


def _fused_vmem_bytes(n_pad, cin_pad, hid_pad, out_pad):
    c_max = max(cin_pad, hid_pad, out_pad)
    a = n_pad * n_pad                            # int8 adjacency, resident once
    x = n_pad * cin_pad * 2                      # bf16 features
    out = n_pad * out_pad * 4                    # f32 log-probs
    inter = 4 * n_pad * c_max * 4                # f32 intermediates (headroom)
    return a + x + out + inter + _weight_bytes(cin_pad, hid_pad, out_pad)


def _pick_tiles(n_pad, cin_pad, hid_pad, out_pad, budget):
    """Largest (tm, tk) whose *total* per-call VMEM fits in `budget`."""
    c_max = max(cin_pad, hid_pad, out_pad)
    w = _weight_bytes(cin_pad, hid_pad, out_pad)
    for tm in (1024, 512, 256, 128):
        if n_pad % tm:
            continue
        if n_pad // tm < 2 and tm != 128:        # keep >= 2 row tiles (2 TCs on v7x)
            continue
        for tk in (512, 256, 128):               # prefer multiples of 256 (MXU cadence)
            if n_pad % tk:
                continue
            a_slab = 2 * tm * tk                 # int8 A, double-buffered
            x_slab = 2 * tk * c_max * 2          # bf16 feature rows, double-buffered
            out_buf = 2 * tm * c_max * 4         # output double buffer (f32 worst case)
            acc = tm * c_max * 4                 # f32 accumulator scratch
            inter = 3 * tm * c_max * 4           # f32 epilogue temporaries
            if w + a_slab + x_slab + out_buf + acc + inter <= budget:
                return tm, tk
    return 128, 128


# ----------------------------------------------------------------------------
# pallas_call wrappers
# ----------------------------------------------------------------------------
def _call_gin_fused(adj, xp, ws, vmem_limit):
    n_pad = adj.shape[0]
    out_pad = ws[-2].shape[1]
    return pl.pallas_call(
        _gin_fused_kernel,
        out_shape=jax.ShapeDtypeStruct((n_pad, out_pad), jnp.float32),
        compiler_params=pltpu.CompilerParams(vmem_limit_bytes=vmem_limit),
    )(adj, xp, *ws)


def _call_gin_layer(adj, xp, w1, b1, w2, b2, tm, tk, vmem_limit):
    n_pad = adj.shape[0]
    cin = xp.shape[1]
    hid = w1.shape[1]
    const = lambda i, k: (0, 0)
    return pl.pallas_call(
        _gin_layer_kernel,
        out_shape=jax.ShapeDtypeStruct((n_pad, hid), jnp.bfloat16),
        grid=(n_pad // tm, n_pad // tk),
        in_specs=[
            pl.BlockSpec((tm, tk), lambda i, k: (i, k)),    # int8 A tile (streamed)
            pl.BlockSpec((tk, cin), lambda i, k: (k, 0)),   # matching feature rows
            _resident_spec((cin, hid), const),
            _resident_spec((1, hid), const),
            _resident_spec((hid, hid), const),
            _resident_spec((1, hid), const),
        ],
        out_specs=pl.BlockSpec((tm, hid), lambda i, k: (i, 0)),
        scratch_shapes=[pltpu.VMEM((tm, cin), jnp.float32)],
        compiler_params=pltpu.CompilerParams(
            dimension_semantics=("parallel", "arbitrary"),
            vmem_limit_bytes=vmem_limit),
    )(adj, xp, w1, b1, w2, b2)


def _call_gin_final(adj, h, w1, b1, w2, b2, wl, bl, tm, tk, vmem_limit):
    n_pad = adj.shape[0]
    hid = h.shape[1]
    out_pad = wl.shape[1]
    const = lambda i, k: (0, 0)
    return pl.pallas_call(
        _gin_final_kernel,
        out_shape=jax.ShapeDtypeStruct((n_pad, out_pad), jnp.float32),
        grid=(n_pad // tm, n_pad // tk),
        in_specs=[
            pl.BlockSpec((tm, tk), lambda i, k: (i, k)),
            pl.BlockSpec((tk, hid), lambda i, k: (k, 0)),
            _resident_spec((hid, hid), const),
            _resident_spec((1, hid), const),
            _resident_spec((hid, hid), const),
            _resident_spec((1, hid), const),
            _resident_spec((hid, out_pad), const),
            _resident_spec((1, out_pad), const),
        ],
        out_specs=pl.BlockSpec((tm, out_pad), lambda i, k: (i, 0)),
        scratch_shapes=[pltpu.VMEM((tm, hid), jnp.float32)],
        compiler_params=pltpu.CompilerParams(
            dimension_semantics=("parallel", "arbitrary"),
            vmem_limit_bytes=vmem_limit),
    )(adj, h, w1, b1, w2, b2, wl, bl)


# ----------------------------------------------------------------------------
# Graph preprocessing (hoisted / cacheable: build once per static graph)
# ----------------------------------------------------------------------------
def build_adjacency(edge_index, num_nodes):
    """Padded dense GIN aggregation operator (A + I) stored in int8.

    agg[i] = sum_{edges src->dst=i} h[src]  ==>  A[dst, src] += 1, plus the
    eps=0 self term folded into the diagonal. int8 is exact for edge
    multiplicities <= 127.
    """
    n_pad = _round_up(max(num_nodes, 1), 128)
    src, dst = edge_index[0], edge_index[1]
    adj = jnp.zeros((n_pad, n_pad), jnp.int32).at[dst, src].add(1)
    diag = jnp.arange(num_nodes)
    adj = adj.at[diag, diag].add(1)
    # TODO(synk): assert/clamp edge multiplicities > 127 for heavy multigraphs.
    return adj.astype(jnp.int8)


# ----------------------------------------------------------------------------
# Forward pass
# ----------------------------------------------------------------------------
def gin_forward(x, adj, params, *, num_nodes):
    """x: (N, Cin) float32 node features; adj: padded int8 (A + I) operator."""
    n = num_nodes
    n_pad = adj.shape[0]
    in_ch = x.shape[1]
    hid = params["w11"].shape[1]
    out_ch = params["wl"].shape[1]

    cin_pad = _round_up(in_ch, 128)
    hid_pad = _round_up(hid, 128)
    out_pad = _round_up(out_ch, 128)

    xp = jnp.zeros((n_pad, cin_pad), jnp.bfloat16)
    xp = xp.at[:n, :in_ch].set(x.astype(jnp.bfloat16))

    def pad_w(w, rows, cols):
        return (jnp.zeros((rows, cols), jnp.bfloat16)
                .at[:w.shape[0], :w.shape[1]].set(w.astype(jnp.bfloat16)))

    def pad_b(b, cols, fill=0.0):
        return (jnp.full((1, cols), fill, jnp.float32)
                .at[:, :b.shape[1]].set(b.astype(jnp.float32)))

    # Fold eval-mode BatchNorm1d into the second Linear of each MLP.
    w12f = params["w12"] * params["s1"]
    b12f = params["b12"] * params["s1"] + params["t1"]
    w22f = params["w22"] * params["s2"]
    b22f = params["b22"] * params["s2"] + params["t2"]

    w11 = pad_w(params["w11"], cin_pad, hid_pad)
    b11 = pad_b(params["b11"], hid_pad)
    w12 = pad_w(w12f, hid_pad, hid_pad)
    b12 = pad_b(b12f, hid_pad)
    w21 = pad_w(params["w21"], hid_pad, hid_pad)
    b21 = pad_b(params["b21"], hid_pad)
    w22 = pad_w(w22f, hid_pad, hid_pad)
    b22 = pad_b(b22f, hid_pad)
    wl = pad_w(params["wl"], hid_pad, out_pad)
    # Padded logit lanes get a huge negative bias so log_softmax ignores them.
    bl = pad_b(params["bl"], out_pad, fill=-1e30)

    vmem_cap = _vmem_capacity_bytes()
    vmem_limit = min(vmem_cap * 3 // 4, 100 * 1024 * 1024)

    fused_bytes = _fused_vmem_bytes(n_pad, cin_pad, hid_pad, out_pad)
    if fused_bytes <= (vmem_limit * 4) // 5:
        # Small-graph / latency regime: one kernel, A streamed from HBM once,
        # layer-1 output never round-trips HBM.
        ws = (w11, b11, w12, b12, w21, b21, w22, b22, wl, bl)
        logp = _call_gin_fused(adj, xp, ws, vmem_limit)
    else:
        # Large-graph regime: K-tiled grid, VMEM footprint independent of N.
        tm, tk = _pick_tiles(n_pad, cin_pad, hid_pad, out_pad, vmem_limit)
        h1 = _call_gin_layer(adj, xp, w11, b11, w12, b12, tm, tk, vmem_limit)
        logp = _call_gin_final(adj, h1, w21, b21, w22, b22, wl, bl,
                               tm, tk, vmem_limit)

    return logp[:n, :out_ch]


# ----------------------------------------------------------------------------
# Pure-JAX reference (f32) for correctness checking
# ----------------------------------------------------------------------------
def gin_reference(x, edge_index, params, num_nodes):
    src, dst = edge_index[0], edge_index[1]
    a = jnp.zeros((num_nodes, num_nodes), jnp.float32).at[dst, src].add(1.0)

    def conv(h, w1, b1, w2, b2, s, t):
        agg = h + a @ h                        # eps = 0
        z = jnp.maximum(agg @ w1 + b1, 0.0)
        z = z @ w2 + b2
        z = z * s + t                          # eval-mode BatchNorm1d
        return jnp.maximum(z, 0.0)             # outer F.relu

    h = conv(x, params["w11"], params["b11"], params["w12"], params["b12"],
             params["s1"], params["t1"])
    h = conv(h, params["w21"], params["b21"], params["w22"], params["b22"],
             params["s2"], params["t2"])
    z = h @ params["wl"] + params["bl"]
    return jax.nn.log_softmax(z, axis=1)


# ----------------------------------------------------------------------------
# Parameter init (PyTorch Linear layout pre-transposed to [in, out])
# ----------------------------------------------------------------------------
def init_params(key, in_channels, hidden_channels, out_channels):
    ks = jax.random.split(key, 10)
    u = lambda k, shape, fan_in: jax.random.uniform(
        k, shape, jnp.float32, -1.0 / jnp.sqrt(fan_in), 1.0 / jnp.sqrt(fan_in))

    p = {}
    # mlp1: Linear(in, hid) -> ReLU -> Linear(hid, hid) -> BatchNorm1d(hid)
    p["w11"] = u(ks[0], (in_channels, hidden_channels), in_channels)
    p["b11"] = u(ks[1], (1, hidden_channels), in_channels)
    p["w12"] = u(ks[2], (hidden_channels, hidden_channels), hidden_channels)
    p["b12"] = u(ks[3], (1, hidden_channels), hidden_channels)
    # BatchNorm1d(hid), eval mode, default stats: gamma=1, beta=0, mean=0, var=1
    p["s1"] = jnp.ones((1, hidden_channels)) / jnp.sqrt(1.0 + 1e-5)
    p["t1"] = jnp.zeros((1, hidden_channels))

    # mlp2: Linear(hid, hid) -> ReLU -> Linear(hid, hid) -> BatchNorm1d(hid)
    p["w21"] = u(ks[4], (hidden_channels, hidden_channels), hidden_channels)
    p["b21"] = u(ks[5], (1, hidden_channels), hidden_channels)
    p["w22"] = u(ks[6], (hidden_channels, hidden_channels), hidden_channels)
    p["b22"] = u(ks[7], (1, hidden_channels), hidden_channels)
    p["s2"] = jnp.ones((1, hidden_channels)) / jnp.sqrt(1.0 + 1e-5)
    p["t2"] = jnp.zeros((1, hidden_channels))

    # Final Linear(hid, out)
    p["wl"] = u(ks[8], (hidden_channels, out_channels), hidden_channels)
    p["bl"] = u(ks[9], (1, out_channels), hidden_channels)
    return p


if __name__ == "__main__":
    N = 16               # number of graph nodes
    IN_CH = 8
    HIDDEN = 32
    OUT_CH = 8
    E = 32               # number of directed edges

    key = jax.random.PRNGKey(0)
    kx, ke, kp = jax.random.split(key, 3)

    x = jax.random.normal(kx, (N, IN_CH), jnp.float32)
    # Deterministic edge list: ring edges + a few random extra edges.
    ring_src = jnp.arange(N, dtype=jnp.int32)
    ring_dst = (ring_src + 1) % N
    extra = jax.random.randint(ke, (2, E - N), 0, N, dtype=jnp.int32)
    edge_index = jnp.concatenate(
        [jnp.stack([ring_src, ring_dst], axis=0), extra], axis=1)  # (2, E)

    params = init_params(kp, IN_CH, HIDDEN, OUT_CH)

    # Adjacency (A + I, int8) built ONCE for the static graph, outside the jit.
    adj = build_adjacency(edge_index, num_nodes=N)

    fwd = jax.jit(functools.partial(gin_forward, num_nodes=N))
    out = fwd(x, adj, params)
    jax.block_until_ready(out)

    assert out.shape == (N, OUT_CH)
    # log_softmax rows should sum (in prob space) to ~1
    assert jnp.allclose(jnp.sum(jnp.exp(out), axis=1), 1.0, atol=1e-3)
    # Match the pure-JAX f32 reference (bf16 matmul tolerance).
    ref = gin_reference(x, edge_index, params, N)
    assert jnp.allclose(out, ref, atol=1e-1, rtol=1e-1)
    print("KERNEL_OK")
</pallas_src>

<mosaic_0001>
module attributes {stable_mosaic.version = 11 : i64} {
  func.func @_gin_fused_kernel(%arg0: memref<128x128xi8, #tpu.memory_space<vmem>>, %arg1: memref<128x128xbf16, #tpu.memory_space<vmem>>, %arg2: memref<128x128xbf16, #tpu.memory_space<vmem>>, %arg3: memref<1x128xf32, #tpu.memory_space<vmem>>, %arg4: memref<128x128xbf16, #tpu.memory_space<vmem>>, %arg5: memref<1x128xf32, #tpu.memory_space<vmem>>, %arg6: memref<128x128xbf16, #tpu.memory_space<vmem>>, %arg7: memref<1x128xf32, #tpu.memory_space<vmem>>, %arg8: memref<128x128xbf16, #tpu.memory_space<vmem>>, %arg9: memref<1x128xf32, #tpu.memory_space<vmem>>, %arg10: memref<128x128xbf16, #tpu.memory_space<vmem>>, %arg11: memref<1x128xf32, #tpu.memory_space<vmem>>, %arg12: memref<128x128xf32, #tpu.memory_space<vmem>>) attributes {dimension_semantics = [], scalar_prefetch = 0 : i64, scratch_operands = 0 : i64, tpu.core_type = #tpu.core_type<tc>} {
    %c0 = arith.constant 0 : index
    %c0_0 = arith.constant 0 : index
    %0 = vector.load %arg0[%c0, %c0_0] : memref<128x128xi8, #tpu.memory_space<vmem>>, vector<128x128xi8>
    %1 = arith.sitofp %0 : vector<128x128xi8> to vector<128x128xf32>
    %2 = arith.truncf %1 : vector<128x128xf32> to vector<128x128xbf16>
    %c0_1 = arith.constant 0 : index
    %c0_2 = arith.constant 0 : index
    %3 = vector.load %arg1[%c0_1, %c0_2] : memref<128x128xbf16, #tpu.memory_space<vmem>>, vector<128x128xbf16>
    %cst = arith.constant dense<0.000000e+00> : vector<128x128xf32>
    %4 = tpu.matmul %2, %3, %cst {dimension_numbers = #tpu.dot_dimension_numbers<[1], [0], [0], [1], [0, 0, 1, 1], [], []>} : vector<128x128xbf16>, vector<128x128xbf16>, vector<128x128xf32> -> vector<128x128xf32>
    %5 = arith.truncf %4 : vector<128x128xf32> to vector<128x128xbf16>
    %c0_3 = arith.constant 0 : index
    %c0_4 = arith.constant 0 : index
    %6 = vector.load %arg2[%c0_3, %c0_4] : memref<128x128xbf16, #tpu.memory_space<vmem>>, vector<128x128xbf16>
    %cst_5 = arith.constant dense<0.000000e+00> : vector<128x128xf32>
    %7 = tpu.matmul %5, %6, %cst_5 {dimension_numbers = #tpu.dot_dimension_numbers<[1], [0], [0], [1], [0, 0, 1, 1], [], []>} : vector<128x128xbf16>, vector<128x128xbf16>, vector<128x128xf32> -> vector<128x128xf32>
    %c0_6 = arith.constant 0 : index
    %c0_7 = arith.constant 0 : index
    %8 = vector.load %arg3[%c0_6, %c0_7] : memref<1x128xf32, #tpu.memory_space<vmem>>, vector<1x128xf32>
    %9 = vector.broadcast %8 : vector<1x128xf32> to vector<128x128xf32>
    %10 = arith.addf %7, %9 : vector<128x128xf32>
    %cst_8 = arith.constant 0.000000e+00 : f32
    %11 = vector.broadcast %cst_8 : f32 to vector<128x128xf32>
    %12 = arith.maximumf %10, %11 : vector<128x128xf32>
    %13 = arith.truncf %12 : vector<128x128xf32> to vector<128x128xbf16>
    %c0_9 = arith.constant 0 : index
    %c0_10 = arith.constant 0 : index
    %14 = vector.load %arg4[%c0_9, %c0_10] : memref<128x128xbf16, #tpu.memory_space<vmem>>, vector<128x128xbf16>
    %cst_11 = arith.constant dense<0.000000e+00> : vector<128x128xf32>
    %15 = tpu.matmul %13, %14, %cst_11 {dimension_numbers = #tpu.dot_dimension_numbers<[1], [0], [0], [1], [0, 0, 1, 1], [], []>} : vector<128x128xbf16>, vector<128x128xbf16>, vector<128x128xf32> -> vector<128x128xf32>
    %c0_12 = arith.constant 0 : index
    %c0_13 = arith.constant 0 : index
    %16 = vector.load %arg5[%c0_12, %c0_13] : memref<1x128xf32, #tpu.memory_space<vmem>>, vector<1x128xf32>
    %17 = vector.broadcast %16 : vector<1x128xf32> to vector<128x128xf32>
    %18 = arith.addf %15, %17 : vector<128x128xf32>
    %cst_14 = arith.constant 0.000000e+00 : f32
    %19 = vector.broadcast %cst_14 : f32 to vector<128x128xf32>
    %20 = arith.maximumf %18, %19 : vector<128x128xf32>
    %21 = arith.truncf %20 : vector<128x128xf32> to vector<128x128xbf16>
    %cst_15 = arith.constant dense<0.000000e+00> : vector<128x128xf32>
    %22 = tpu.matmul %2, %21, %cst_15 {dimension_numbers = #tpu.dot_dimension_numbers<[1], [0], [0], [1], [0, 0, 1, 1], [], []>} : vector<128x128xbf16>, vector<128x128xbf16>, vector<128x128xf32> -> vector<128x128xf32>
    %23 = arith.truncf %22 : vector<128x128xf32> to vector<128x128xbf16>
    %c0_16 = arith.constant 0 : index
    %c0_17 = arith.constant 0 : index
    %24 = vector.load %arg6[%c0_16, %c0_17] : memref<128x128xbf16, #tpu.memory_space<vmem>>, vector<128x128xbf16>
    %cst_18 = arith.constant dense<0.000000e+00> : vector<128x128xf32>
    %25 = tpu.matmul %23, %24, %cst_18 {dimension_numbers = #tpu.dot_dimension_numbers<[1], [0], [0], [1], [0, 0, 1, 1], [], []>} : vector<128x128xbf16>, vector<128x128xbf16>, vector<128x128xf32> -> vector<128x128xf32>
    %c0_19 = arith.constant 0 : index
    %c0_20 = arith.constant 0 : index
    %26 = vector.load %arg7[%c0_19, %c0_20] : memref<1x128xf32, #tpu.memory_space<vmem>>, vector<1x128xf32>
    %27 = vector.broadcast %26 : vector<1x128xf32> to vector<128x128xf32>
    %28 = arith.addf %25, %27 : vector<128x128xf32>
    %cst_21 = arith.constant 0.000000e+00 : f32
    %29 = vector.broadcast %cst_21 : f32 to vector<128x128xf32>
    %30 = arith.maximumf %28, %29 : vector<128x128xf32>
    %31 = arith.truncf %30 : vector<128x128xf32> to vector<128x128xbf16>
    %c0_22 = arith.constant 0 : index
    %c0_23 = arith.constant 0 : index
    %32 = vector.load %arg8[%c0_22, %c0_23] : memref<128x128xbf16, #tpu.memory_space<vmem>>, vector<128x128xbf16>
    %cst_24 = arith.constant dense<0.000000e+00> : vector<128x128xf32>
    %33 = tpu.matmul %31, %32, %cst_24 {dimension_numbers = #tpu.dot_dimension_numbers<[1], [0], [0], [1], [0, 0, 1, 1], [], []>} : vector<128x128xbf16>, vector<128x128xbf16>, vector<128x128xf32> -> vector<128x128xf32>
    %c0_25 = arith.constant 0 : index
    %c0_26 = arith.constant 0 : index
    %34 = vector.load %arg9[%c0_25, %c0_26] : memref<1x128xf32, #tpu.memory_space<vmem>>, vector<1x128xf32>
    %35 = vector.broadcast %34 : vector<1x128xf32> to vector<128x128xf32>
    %36 = arith.addf %33, %35 : vector<128x128xf32>
    %cst_27 = arith.constant 0.000000e+00 : f32
    %37 = vector.broadcast %cst_27 : f32 to vector<128x128xf32>
    %38 = arith.maximumf %36, %37 : vector<128x128xf32>
    %39 = arith.truncf %38 : vector<128x128xf32> to vector<128x128xbf16>
    %c0_28 = arith.constant 0 : index
    %c0_29 = arith.constant 0 : index
    %40 = vector.load %arg10[%c0_28, %c0_29] : memref<128x128xbf16, #tpu.memory_space<vmem>>, vector<128x128xbf16>
    %cst_30 = arith.constant dense<0.000000e+00> : vector<128x128xf32>
    %41 = tpu.matmul %39, %40, %cst_30 {dimension_numbers = #tpu.dot_dimension_numbers<[1], [0], [0], [1], [0, 0, 1, 1], [], []>} : vector<128x128xbf16>, vector<128x128xbf16>, vector<128x128xf32> -> vector<128x128xf32>
    %c0_31 = arith.constant 0 : index
    %c0_32 = arith.constant 0 : index
    %42 = vector.load %arg11[%c0_31, %c0_32] : memref<1x128xf32, #tpu.memory_space<vmem>>, vector<1x128xf32>
    %43 = vector.broadcast %42 : vector<1x128xf32> to vector<128x128xf32>
    %44 = arith.addf %41, %43 : vector<128x128xf32>
    %cst_33 = arith.constant dense<0xFF800000> : vector<128xf32>
    %45 = vector.multi_reduction <maximumf>, %44, %cst_33 [1] : vector<128x128xf32> to vector<128xf32>
    %46 = vector.shape_cast %45 : vector<128xf32> to vector<128x1xf32>
    %47 = vector.broadcast %46 : vector<128x1xf32> to vector<128x128xf32>
    %48 = arith.subf %44, %47 : vector<128x128xf32>
    %49 = math.exp %48 : vector<128x128xf32>
    %cst_34 = arith.constant dense<0.000000e+00> : vector<128xf32>
    %50 = vector.multi_reduction <add>, %49, %cst_34 [1] : vector<128x128xf32> to vector<128xf32>
    %51 = vector.shape_cast %50 : vector<128xf32> to vector<128x1xf32>
    %52 = math.log %51 : vector<128x1xf32>
    %53 = vector.broadcast %52 : vector<128x1xf32> to vector<128x128xf32>
    %54 = arith.subf %48, %53 : vector<128x128xf32>
    %c0_35 = arith.constant 0 : index
    %c0_36 = arith.constant 0 : index
    %55 = vector.load %arg12[%c0_35, %c0_36] : memref<128x128xf32, #tpu.memory_space<vmem>>, vector<128x128xf32>
    tpu.vector_store %arg12[%c0_35, %c0_36], %54 {strides = array<i32>} : memref<128x128xf32, #tpu.memory_space<vmem>>, vector<128x128xf32>,
    return
  }
}

</mosaic_0001>

<llo_original>
// kernel: gin_forward.1
$region0: #{gin_forward.1}
  #allocation0 [shape = 'u32[]', space=smem, size = 0x4, offset = 0x4, fixed_abs, tag = 'smem constant byte address 0x4 - core index']
  #allocation1 [shape = 'u32[144,128]{1,0:T(1,128)}', space=vmem, size = 0x12000, scoped, tag = 'internal scratch']
  %s0 = inlined_call_operand.vmem [shape: s8[128,128], index: 0, kind: input, shape index: {}]
  %s1 = inlined_call_operand.vmem [shape: bf16[128,128], index: 1, kind: input, shape index: {}]
  %s2 = inlined_call_operand.vmem [shape: bf16[128,128], index: 2, kind: input, shape index: {}]
  %s3 = inlined_call_operand.vmem [shape: f32[1,128], index: 3, kind: input, shape index: {}]
  %s4 = inlined_call_operand.vmem [shape: bf16[128,128], index: 4, kind: input, shape index: {}]
  %s5 = inlined_call_operand.vmem [shape: f32[1,128], index: 5, kind: input, shape index: {}]
  %s6 = inlined_call_operand.vmem [shape: bf16[128,128], index: 6, kind: input, shape index: {}]
  %s7 = inlined_call_operand.vmem [shape: f32[1,128], index: 7, kind: input, shape index: {}]
  %s8 = inlined_call_operand.vmem [shape: bf16[128,128], index: 8, kind: input, shape index: {}]
  %s9 = inlined_call_operand.vmem [shape: f32[1,128], index: 9, kind: input, shape index: {}]
  %s10 = inlined_call_operand.vmem [shape: bf16[128,128], index: 10, kind: input, shape index: {}]
  %s11 = inlined_call_operand.vmem [shape: f32[1,128], index: 11, kind: input, shape index: {}]
  %s12 = inlined_call_operand.vmem [shape: f32[128,128], index: 12, kind: output, shape index: {}]
  %s13 = sld [smem:[#allocation0]]
  $region58: #{gin_forward.1} parent=0
    _
  %s15 = ssub.s32 1, %s13
  %s16 = scalar_select 0, %s15, %s13
  // Predicated region
  $region2: #{gin_forward.1} parent=0 // pred_check
    _
  $region3: #{gin_forward.1} parent=0 // pred_check_branch
    %18 = sbr.rel (0) target = $region5
  $region4: #{gin_forward.1} parent=0 // pred_region
    _
  $region5: #{gin_forward.1} parent=0 // pred_fallthru
    _
  // Predicated region
  $region6: #{gin_forward.1} parent=0 // pred_check
    _
  $region7: #{gin_forward.1} parent=0 // pred_check_branch
    %20 = sbr.rel (0) target = $region9
  $region8: #{gin_forward.1} parent=0 // pred_region
    _
  $region9: #{gin_forward.1} parent=0 // pred_fallthru
    _
  // Predicated region
  $region10: #{gin_forward.1} parent=0 // pred_check
    _
  $region11: #{gin_forward.1} parent=0 // pred_check_branch
    %22 = sbr.rel (0) target = $region13
  $region12: #{gin_forward.1} parent=0 // pred_region
    _
  $region13: #{gin_forward.1} parent=0 // pred_fallthru
    _
  // Predicated region
  $region14: #{gin_forward.1} parent=0 // pred_check
    _
  $region15: #{gin_forward.1} parent=0 // pred_check_branch
    %24 = sbr.rel (0) target = $region17
  $region16: #{gin_forward.1} parent=0 // pred_region
    _
  $region17: #{gin_forward.1} parent=0 // pred_fallthru
    _
  // Predicated region
  $region18: #{gin_forward.1} parent=0 // pred_check
    _
  $region19: #{gin_forward.1} parent=0 // pred_check_branch
    %26 = sbr.rel (0) target = $region21
  $region20: #{gin_forward.1} parent=0 // pred_region
    _
  $region21: #{gin_forward.1} parent=0 // pred_fallthru
    _
  // Predicated region
  $region22: #{gin_forward.1} parent=0 // pred_check
    _
  $region23: #{gin_forward.1} parent=0 // pred_check_branch
    %28 = sbr.rel (0) target = $region25
  $region24: #{gin_forward.1} parent=0 // pred_region
    _
  $region25: #{gin_forward.1} parent=0 // pred_fallthru
    _
  // Predicated region
  $region26: #{gin_forward.1} parent=0 // pred_check
    _
  $region27: #{gin_forward.1} parent=0 // pred_check_branch
    %30 = sbr.rel (0) target = $region29
  $region28: #{gin_forward.1} parent=0 // pred_region
    _
  $region29: #{gin_forward.1} parent=0 // pred_fallthru
    _
  // Predicated region
  $region30: #{gin_forward.1} parent=0 // pred_check
    _
  $region31: #{gin_forward.1} parent=0 // pred_check_branch
    %32 = sbr.rel (0) target = $region33
  $region32: #{gin_forward.1} parent=0 // pred_region
    _
  $region33: #{gin_forward.1} parent=0 // pred_fallthru
    _
  // Predicated region
  $region34: #{gin_forward.1} parent=0 // pred_check
    _
  $region35: #{gin_forward.1} parent=0 // pred_check_branch
    %34 = sbr.rel (0) target = $region37
  $region36: #{gin_forward.1} parent=0 // pred_region
    _
  $region37: #{gin_forward.1} parent=0 // pred_fallthru
    _
  // Predicated region
  $region38: #{gin_forward.1} parent=0 // pred_check
    _
  $region39: #{gin_forward.1} parent=0 // pred_check_branch
    %36 = sbr.rel (0) target = $region41
  $region40: #{gin_forward.1} parent=0 // pred_region
    _
  $region41: #{gin_forward.1} parent=0 // pred_fallthru
    _
  // Predicated region
  $region42: #{gin_forward.1} parent=0 // pred_check
    _
  $region43: #{gin_forward.1} parent=0 // pred_check_branch
    %38 = sbr.rel (0) target = $region45
  $region44: #{gin_forward.1} parent=0 // pred_region
    _
  $region45: #{gin_forward.1} parent=0 // pred_fallthru
    _
  // Predicated region
  $region46: #{gin_forward.1} parent=0 // pred_check
    _
  $region47: #{gin_forward.1} parent=0 // pred_check_branch
    %40 = sbr.rel (0) target = $region49
  $region48: #{gin_forward.1} parent=0 // pred_region
    _
  $region49: #{gin_forward.1} parent=0 // pred_fallthru
    _
  %v42 = vld [vmem:[%s0] sm:$0xff]
  %v43 = vld [vmem:[%s0 + $0x8] sm:$0xff]
  %v44 = vld [vmem:[%s0 + $0x10] sm:$0xff]
  %v45 = vld [vmem:[%s0 + $0x18] sm:$0xff]
  %v46 = vunpack.c.l.s8.bf16 %v42
  %v47 = vunpack.c.h.s8.bf16 %v42
  %v48 = vunpack.c.l.s8.bf16 %v43
  %v49 = vunpack.c.h.s8.bf16 %v43
  %v50 = vunpack.c.l.s8.bf16 %v44
  %v51 = vunpack.c.h.s8.bf16 %v44
  %v52 = vunpack.c.l.s8.bf16 %v45
  %v53 = vunpack.c.h.s8.bf16 %v45
  %v54 = vld [vmem:[%s1] sm:$0xf]
  %v55 = vld [vmem:[%s1 + $0x4] sm:$0xf]
  %v56 = vld [vmem:[%s1 + $0x8] sm:$0xf]
  %v57 = vld [vmem:[%s1 + $0xc] sm:$0xf]
  %v58 = vld [vmem:[%s1 + $0x10] sm:$0xf]
  %v59 = vld [vmem:[%s1 + $0x14] sm:$0xf]
  %v60 = vld [vmem:[%s1 + $0x18] sm:$0xf]
  %v61 = vld [vmem:[%s1 + $0x1c] sm:$0xf]
  %v62 = vld [vmem:[%s1 + $0x20] sm:$0xf]
  %v63 = vld [vmem:[%s1 + $0x24] sm:$0xf]
  %v64 = vld [vmem:[%s1 + $0x28] sm:$0xf]
  %v65 = vld [vmem:[%s1 + $0x2c] sm:$0xf]
  %v66 = vld [vmem:[%s1 + $0x30] sm:$0xf]
  %v67 = vld [vmem:[%s1 + $0x34] sm:$0xf]
  %v68 = vld [vmem:[%s1 + $0x38] sm:$0xf]
  %v69 = vld [vmem:[%s1 + $0x3c] sm:$0xf]
  %v86 = vunpack.c.l.b16 %v54
  %v87 = vunpack.c.l.b16 %v55
  %v88 = vunpack.c.l.b16 %v56
  %v89 = vunpack.c.l.b16 %v57
  %v90 = vunpack.c.l.b16 %v58
  %v91 = vunpack.c.l.b16 %v59
  %v92 = vunpack.c.l.b16 %v60
  %v93 = vunpack.c.l.b16 %v61
  %v94 = vunpack.c.l.b16 %v62
  %v95 = vunpack.c.l.b16 %v63
  %v96 = vunpack.c.l.b16 %v64
  %v97 = vunpack.c.l.b16 %v65
  %v98 = vunpack.c.l.b16 %v66
  %v99 = vunpack.c.l.b16 %v67
  %v100 = vunpack.c.l.b16 %v68
  %v101 = vunpack.c.l.b16 %v69
  %v102 = vpack.c.b16 %v87, %v86
  %v103 = vpack.c.b16 %v89, %v88
  %v104 = vpack.c.b16 %v91, %v90
  %v105 = vpack.c.b16 %v93, %v92
  %v106 = vpack.c.b16 %v95, %v94
  %v107 = vpack.c.b16 %v97, %v96
  %v108 = vpack.c.b16 %v99, %v98
  %v109 = vpack.c.b16 %v101, %v100
  %118 = vmatprep.subr.bf16.mxu0 0
  %119 = vmatpush1.bf16.msra.mxu0 %v102
  %120 = vmatprep.subr.bf16.mxu0 0
  %121 = vmatpush1.bf16.msra.mxu0 %v103
  %122 = vmatprep.subr.bf16.mxu0 0
  %123 = vmatpush1.bf16.msra.mxu0 %v104
  %124 = vmatprep.subr.bf16.mxu0 0
  %125 = vmatpush1.bf16.msra.mxu0 %v105
  %126 = vmatprep.subr.bf16.mxu0 0
  %127 = vmatpush1.bf16.msra.mxu0 %v106
  %128 = vmatprep.subr.bf16.mxu0 0
  %129 = vmatpush1.bf16.msra.mxu0 %v107
  %130 = vmatprep.subr.bf16.mxu0 0
  %131 = vmatpush1.bf16.msra.mxu0 %v108
  %132 = vmatprep.subr.bf16.mxu0 0
  %133 = vmatpush1.bf16.msra.mxu0 %v109
  %134 = vmatprep.subr.bf16.mxu0 0
  %135 = vmatpush1.bf16.msra.mxu0 0
  %136 = vmatprep.subr.bf16.mxu0 0
  %137 = vmatpush1.bf16.msra.mxu0 0
  %138 = vmatprep.subr.bf16.mxu0 0
  %139 = vmatpush1.bf16.msra.mxu0 0
  %140 = vmatprep.subr.bf16.mxu0 0
  %141 = vmatpush1.bf16.msra.mxu0 0
  %142 = vmatprep.subr.bf16.mxu0 0
  %143 = vmatpush1.bf16.msra.mxu0 0
  %144 = vmatprep.subr.bf16.mxu0 0
  %145 = vmatpush1.bf16.msra.mxu0 0
  %146 = vmatprep.subr.bf16.mxu0 0
  %147 = vmatpush1.bf16.msra.mxu0 0
  %148 = vmatprep.subr.bf16.mxu0 0
  %149 = vmatpush1.bf16.msra.mxu0 0
  %150 = vmatprep.mubr.bf16.mxu0 0
  %151 = vmatmul.mubr.bf16.gmra.mrb[0].mxu0 %v46
  %v152 = vpop.f32.mrb[0].mxu0
  %v153 = vadd.f32 0.0, %v152
  %v154 = vpop.f32.mrb[0].mxu0
  %v155 = vpop.f32.mrb[0].mxu0
  %v156 = vadd.f32 0.0, %v155
  %v157 = vpop.f32.mrb[0].mxu0
  %158 = vmatprep.mubr.bf16.mxu0 0
  %159 = vmatmul.mubr.bf16.gmra.mrb[0].mxu0 %v47
  %v160 = vpop.f32.mrb[0].mxu0
  %v161 = vadd.f32 0.0, %v160
  %v162 = vpop.f32.mrb[0].mxu0
  %v163 = vpop.f32.mrb[0].mxu0
  %v164 = vadd.f32 0.0, %v163
  %v165 = vpop.f32.mrb[0].mxu0
  %166 = vmatprep.mubr.bf16.mxu0 0
  %167 = vmatmul.mubr.bf16.gmra.mrb[0].mxu0 %v48
  %v168 = vpop.f32.mrb[0].mxu0
  %v169 = vadd.f32 0.0, %v168
  %v170 = vpop.f32.mrb[0].mxu0
  %v171 = vpop.f32.mrb[0].mxu0
  %v172 = vadd.f32 0.0, %v171
  %v173 = vpop.f32.mrb[0].mxu0
  %174 = vmatprep.mubr.bf16.mxu0 0
  %175 = vmatmul.mubr.bf16.gmra.mrb[0].mxu0 %v49
  %v176 = vpop.f32.mrb[0].mxu0
  %v177 = vadd.f32 0.0, %v176
  %v178 = vpop.f32.mrb[0].mxu0
  %v179 = vpop.f32.mrb[0].mxu0
  %v180 = vadd.f32 0.0, %v179
  %v181 = vpop.f32.mrb[0].mxu0
  %182 = vmatprep.mubr.bf16.mxu0 0
  %183 = vmatmul.mubr.bf16.gmra.mrb[0].mxu0 %v50
  %v184 = vpop.f32.mrb[0].mxu0
  %v185 = vadd.f32 0.0, %v184
  %v186 = vpop.f32.mrb[0].mxu0
  %v187 = vpop.f32.mrb[0].mxu0
  %v188 = vadd.f32 0.0, %v187
  %v189 = vpop.f32.mrb[0].mxu0
  %190 = vmatprep.mubr.bf16.mxu0 0
  %191 = vmatmul.mubr.bf16.gmra.mrb[0].mxu0 %v51
  %v192 = vpop.f32.mrb[0].mxu0
  %v193 = vadd.f32 0.0, %v192
  %v194 = vpop.f32.mrb[0].mxu0
  %v195 = vpop.f32.mrb[0].mxu0
  %v196 = vadd.f32 0.0, %v195
  %v197 = vpop.f32.mrb[0].mxu0
  %198 = vmatprep.mubr.bf16.mxu0 0
  %199 = vmatmul.mubr.bf16.gmra.mrb[0].mxu0 %v52
  %v200 = vpop.f32.mrb[0].mxu0
  %v201 = vadd.f32 0.0, %v200
  %v202 = vpop.f32.mrb[0].mxu0
  %v203 = vpop.f32.mrb[0].mxu0
  %v204 = vadd.f32 0.0, %v203
  %v205 = vpop.f32.mrb[0].mxu0
  %206 = vmatprep.mubr.bf16.mxu0 0
  %207 = vmatmul.mubr.bf16.gmra.mrb[0].mxu0 %v53
  %v208 = vpop.f32.mrb[0].mxu0
  %v209 = vadd.f32 0.0, %v208
  %v210 = vpop.f32.mrb[0].mxu0
  %v211 = vpop.f32.mrb[0].mxu0
  %v212 = vadd.f32 0.0, %v211
  %v213 = vpop.f32.mrb[0].mxu0
  %214 = vdwg.mxu0
  %v215 = vpack.c.bf16 %v156, %v153
  %v216 = vpack.c.bf16 %v164, %v161
  %v217 = vpack.c.bf16 %v172, %v169
  %v218 = vpack.c.bf16 %v180, %v177
  %v219 = vpack.c.bf16 %v188, %v185
  %v220 = vpack.c.bf16 %v196, %v193
  %v221 = vpack.c.bf16 %v204, %v201
  %v222 = vpack.c.bf16 %v212, %v209
  %v223 = vld [vmem:[%s2] sm:$0xf]
  %v224 = vld [vmem:[%s2 + $0x4] sm:$0xf]
  %v225 = vld [vmem:[%s2 + $0x8] sm:$0xf]
  %v226 = vld [vmem:[%s2 + $0xc] sm:$0xf]
  %v227 = vld [vmem:[%s2 + $0x10] sm:$0xf]
  %v228 = vld [vmem:[%s2 + $0x14] sm:$0xf]
  %v229 = vld [vmem:[%s2 + $0x18] sm:$0xf]
  %v230 = vld [vmem:[%s2 + $0x1c] sm:$0xf]
  %v231 = vld [vmem:[%s2 + $0x20] sm:$0xf]
  %v232 = vld [vmem:[%s2 + $0x24] sm:$0xf]
  %v233 = vld [vmem:[%s2 + $0x28] sm:$0xf]
  %v234 = vld [vmem:[%s2 + $0x2c] sm:$0xf]
  %v235 = vld [vmem:[%s2 + $0x30] sm:$0xf]
  %v236 = vld [vmem:[%s2 + $0x34] sm:$0xf]
  %v237 = vld [vmem:[%s2 + $0x38] sm:$0xf]
  %v238 = vld [vmem:[%s2 + $0x3c] sm:$0xf]
  %v239 = vld [vmem:[%s3] sm:$0x1]
  %v241 = vlaneseq
  %v242 = vshrl.u32 %v241, 7
  %v243 = vsub.s32 0, %v242
  %v244 = vrot.slane %v239, %v243
  %v262 = vunpack.c.l.b16 %v223
  %v263 = vunpack.c.l.b16 %v224
  %v264 = vunpack.c.l.b16 %v225
  %v265 = vunpack.c.l.b16 %v226
  %v266 = vunpack.c.l.b16 %v227
  %v267 = vunpack.c.l.b16 %v228
  %v268 = vunpack.c.l.b16 %v229
  %v269 = vunpack.c.l.b16 %v230
  %v270 = vunpack.c.l.b16 %v231
  %v271 = vunpack.c.l.b16 %v232
  %v272 = vunpack.c.l.b16 %v233
  %v273 = vunpack.c.l.b16 %v234
  %v274 = vunpack.c.l.b16 %v235
  %v275 = vunpack.c.l.b16 %v236
  %v276 = vunpack.c.l.b16 %v237
  %v277 = vunpack.c.l.b16 %v238
  %v278 = vpack.c.b16 %v263, %v262
  %v279 = vpack.c.b16 %v265, %v264
  %v280 = vpack.c.b16 %v267, %v266
  %v281 = vpack.c.b16 %v269, %v268
  %v282 = vpack.c.b16 %v271, %v270
  %v283 = vpack.c.b16 %v273, %v272
  %v284 = vpack.c.b16 %v275, %v274
  %v285 = vpack.c.b16 %v277, %v276
  %294 = vmatprep.subr.bf16.mxu0 0
  %295 = vmatpush1.bf16.msra.mxu0 %v278
  %296 = vmatprep.subr.bf16.mxu0 0
  %297 = vmatpush1.bf16.msra.mxu0 %v279
  %298 = vmatprep.subr.bf16.mxu0 0
  %299 = vmatpush1.bf16.msra.mxu0 %v280
  %300 = vmatprep.subr.bf16.mxu0 0
  %301 = vmatpush1.bf16.msra.mxu0 %v281
  %302 = vmatprep.subr.bf16.mxu0 0
  %303 = vmatpush1.bf16.msra.mxu0 %v282
  %304 = vmatprep.subr.bf16.mxu0 0
  %305 = vmatpush1.bf16.msra.mxu0 %v283
  %306 = vmatprep.subr.bf16.mxu0 0
  %307 = vmatpush1.bf16.msra.mxu0 %v284
  %308 = vmatprep.subr.bf16.mxu0 0
  %309 = vmatpush1.bf16.msra.mxu0 %v285
  %310 = vmatprep.subr.bf16.mxu0 0
  %311 = vmatpush1.bf16.msra.mxu0 0
  %312 = vmatprep.subr.bf16.mxu0 0
  %313 = vmatpush1.bf16.msra.mxu0 0
  %314 = vmatprep.subr.bf16.mxu0 0
  %315 = vmatpush1.bf16.msra.mxu0 0
  %316 = vmatprep.subr.bf16.mxu0 0
  %317 = vmatpush1.bf16.msra.mxu0 0
  %318 = vmatprep.subr.bf16.mxu0 0
  %319 = vmatpush1.bf16.msra.mxu0 0
  %320 = vmatprep.subr.bf16.mxu0 0
  %321 = vmatpush1.bf16.msra.mxu0 0
  %322 = vmatprep.subr.bf16.mxu0 0
  %323 = vmatpush1.bf16.msra.mxu0 0
  %324 = vmatprep.subr.bf16.mxu0 0
  %325 = vmatpush1.bf16.msra.mxu0 0
  %326 = vmatprep.mubr.bf16.mxu0 0
  %327 = vmatmul.mubr.bf16.gmra.mrb[0].mxu0 %v215
  %v328 = vpop.f32.mrb[0].mxu0
  %v329 = vadd.f32 %v244, %v328
  %v330 = vpop.f32.mrb[0].mxu0
  %v331 = vpop.f32.mrb[0].mxu0
  %v332 = vadd.f32 %v244, %v331
  %v333 = vpop.f32.mrb[0].mxu0
  %334 = vmatprep.mubr.bf16.mxu0 0
  %335 = vmatmul.mubr.bf16.gmra.mrb[0].mxu0 %v216
  %v336 = vpop.f32.mrb[0].mxu0
  %v337 = vadd.f32 %v244, %v336
  %v338 = vpop.f32.mrb[0].mxu0
  %v339 = vpop.f32.mrb[0].mxu0
  %v340 = vadd.f32 %v244, %v339
  %v341 = vpop.f32.mrb[0].mxu0
  %342 = vmatprep.mubr.bf16.mxu0 0
  %343 = vmatmul.mubr.bf16.gmra.mrb[0].mxu0 %v217
  %v344 = vpop.f32.mrb[0].mxu0
  %v345 = vadd.f32 %v244, %v344
  %v346 = vpop.f32.mrb[0].mxu0
  %v347 = vpop.f32.mrb[0].mxu0
  %v348 = vadd.f32 %v244, %v347
  %v349 = vpop.f32.mrb[0].mxu0
  %350 = vmatprep.mubr.bf16.mxu0 0
  %351 = vmatmul.mubr.bf16.gmra.mrb[0].mxu0 %v218
  %v352 = vpop.f32.mrb[0].mxu0
  %v353 = vadd.f32 %v244, %v352
  %v354 = vpop.f32.mrb[0].mxu0
  %v355 = vpop.f32.mrb[0].mxu0
  %v356 = vadd.f32 %v244, %v355
  %v357 = vpop.f32.mrb[0].mxu0
  %358 = vmatprep.mubr.bf16.mxu0 0
  %359 = vmatmul.mubr.bf16.gmra.mrb[0].mxu0 %v219
  %v360 = vpop.f32.mrb[0].mxu0
  %v361 = vadd.f32 %v244, %v360
  %v362 = vpop.f32.mrb[0].mxu0
  %v363 = vpop.f32.mrb[0].mxu0
  %v364 = vadd.f32 %v244, %v363
  %v365 = vpop.f32.mrb[0].mxu0
  %366 = vmatprep.mubr.bf16.mxu0 0
  %367 = vmatmul.mubr.bf16.gmra.mrb[0].mxu0 %v220
  %v368 = vpop.f32.mrb[0].mxu0
  %v369 = vadd.f32 %v244, %v368
  %v370 = vpop.f32.mrb[0].mxu0
  %v371 = vpop.f32.mrb[0].mxu0
  %v372 = vadd.f32 %v244, %v371
  %v373 = vpop.f32.mrb[0].mxu0
  %374 = vmatprep.mubr.bf16.mxu0 0
  %375 = vmatmul.mubr.bf16.gmra.mrb[0].mxu0 %v221
  %v376 = vpop.f32.mrb[0].mxu0
  %v377 = vadd.f32 %v244, %v376
  %v378 = vpop.f32.mrb[0].mxu0
  %v379 = vpop.f32.mrb[0].mxu0
  %v380 = vadd.f32 %v244, %v379
  %v381 = vpop.f32.mrb[0].mxu0
  %382 = vmatprep.mubr.bf16.mxu0 0
  %383 = vmatmul.mubr.bf16.gmra.mrb[0].mxu0 %v222
  %v384 = vpop.f32.mrb[0].mxu0
  %v385 = vadd.f32 %v244, %v384
  %v386 = vpop.f32.mrb[0].mxu0
  %v387 = vpop.f32.mrb[0].mxu0
  %v388 = vadd.f32 %v244, %v387
  %v389 = vpop.f32.mrb[0].mxu0
  %390 = vdwg.mxu0
  %v391 = vmax.f32 %v329, 0.0
  %v392 = vmax.f32 %v332, 0.0
  %v393 = vmax.f32 %v337, 0.0
  %v394 = vmax.f32 %v340, 0.0
  %v395 = vmax.f32 %v345, 0.0
  %v396 = vmax.f32 %v348, 0.0
  %v397 = vmax.f32 %v353, 0.0
  %v398 = vmax.f32 %v356, 0.0
  %v399 = vmax.f32 %v361, 0.0
  %v400 = vmax.f32 %v364, 0.0
  %v401 = vmax.f32 %v369, 0.0
  %v402 = vmax.f32 %v372, 0.0
  %v403 = vmax.f32 %v377, 0.0
  %v404 = vmax.f32 %v380, 0.0
  %v405 = vmax.f32 %v385, 0.0
  %v406 = vmax.f32 %v388, 0.0
  %v407 = vpack.c.bf16 %v392, %v391
  %v408 = vpack.c.bf16 %v394, %v393
  %v409 = vpack.c.bf16 %v396, %v395
  %v410 = vpack.c.bf16 %v398, %v397
  %v411 = vpack.c.bf16 %v400, %v399
  %v412 = vpack.c.bf16 %v402, %v401
  %v413 = vpack.c.bf16 %v404, %v403
  %v414 = vpack.c.bf16 %v406, %v405
  %v415 = vld [vmem:[%s4] sm:$0xf]
  %v416 = vld [vmem:[%s4 + $0x4] sm:$0xf]
  %v417 = vld [vmem:[%s4 + $0x8] sm:$0xf]
  %v418 = vld [vmem:[%s4 + $0xc] sm:$0xf]
  %v419 = vld [vmem:[%s4 + $0x10] sm:$0xf]
  %v420 = vld [vmem:[%s4 + $0x14] sm:$0xf]
  %v421 = vld [vmem:[%s4 + $0x18] sm:$0xf]
  %v422 = vld [vmem:[%s4 + $0x1c] sm:$0xf]
  %v423 = vld [vmem:[%s4 + $0x20] sm:$0xf]
  %v424 = vld [vmem:[%s4 + $0x24] sm:$0xf]
  %v425 = vld [vmem:[%s4 + $0x28] sm:$0xf]
  %v426 = vld [vmem:[%s4 + $0x2c] sm:$0xf]
  %v427 = vld [vmem:[%s4 + $0x30] sm:$0xf]
  %v428 = vld [vmem:[%s4 + $0x34] sm:$0xf]
  %v429 = vld [vmem:[%s4 + $0x38] sm:$0xf]
  %v430 = vld [vmem:[%s4 + $0x3c] sm:$0xf]
  %v431 = vld [vmem:[%s5] sm:$0x1]
  %v433 = vlaneseq
  %v434 = vshrl.u32 %v433, 7
  %v435 = vsub.s32 0, %v434
  %v436 = vrot.slane %v431, %v435
  %v454 = vunpack.c.l.b16 %v415
  %v455 = vunpack.c.l.b16 %v416
  %v456 = vunpack.c.l.b16 %v417
  %v457 = vunpack.c.l.b16 %v418
  %v458 = vunpack.c.l.b16 %v419
  %v459 = vunpack.c.l.b16 %v420
  %v460 = vunpack.c.l.b16 %v421
  %v461 = vunpack.c.l.b16 %v422
  %v462 = vunpack.c.l.b16 %v423
  %v463 = vunpack.c.l.b16 %v424
  %v464 = vunpack.c.l.b16 %v425
  %v465 = vunpack.c.l.b16 %v426
  %v466 = vunpack.c.l.b16 %v427
  %v467 = vunpack.c.l.b16 %v428
  %v468 = vunpack.c.l.b16 %v429
  %v469 = vunpack.c.l.b16 %v430
  %v470 = vpack.c.b16 %v455, %v454
  %v471 = vpack.c.b16 %v457, %v456
  %v472 = vpack.c.b16 %v459, %v458
  %v473 = vpack.c.b16 %v461, %v460
  %v474 = vpack.c.b16 %v463, %v462
  %v475 = vpack.c.b16 %v465, %v464
  %v476 = vpack.c.b16 %v467, %v466
  %v477 = vpack.c.b16 %v469, %v468
  %486 = vmatprep.subr.bf16.mxu0 0
  %487 = vmatpush1.bf16.msra.mxu0 %v470
  %488 = vmatprep.subr.bf16.mxu0 0
  %489 = vmatpush1.bf16.msra.mxu0 %v471
  %490 = vmatprep.subr.bf16.mxu0 0
  %491 = vmatpush1.bf16.msra.mxu0 %v472
  %492 = vmatprep.subr.bf16.mxu0 0
  %493 = vmatpush1.bf16.msra.mxu0 %v473
  %494 = vmatprep.subr.bf16.mxu0 0
  %495 = vmatpush1.bf16.msra.mxu0 %v474
  %496 = vmatprep.subr.bf16.mxu0 0
  %497 = vmatpush1.bf16.msra.mxu0 %v475
  %498 = vmatprep.subr.bf16.mxu0 0
  %499 = vmatpush1.bf16.msra.mxu0 %v476
  %500 = vmatprep.subr.bf16.mxu0 0
  %501 = vmatpush1.bf16.msra.mxu0 %v477
  %502 = vmatprep.subr.bf16.mxu0 0
  %503 = vmatpush1.bf16.msra.mxu0 0
  %504 = vmatprep.subr.bf16.mxu0 0
  %505 = vmatpush1.bf16.msra.mxu0 0
  %506 = vmatprep.subr.bf16.mxu0 0
  %507 = vmatpush1.bf16.msra.mxu0 0
  %508 = vmatprep.subr.bf16.mxu0 0
  %509 = vmatpush1.bf16.msra.mxu0 0
  %510 = vmatprep.subr.bf16.mxu0 0
  %511 = vmatpush1.bf16.msra.mxu0 0
  %512 = vmatprep.subr.bf16.mxu0 0
  %513 = vmatpush1.bf16.msra.mxu0 0
  %514 = vmatprep.subr.bf16.mxu0 0
  %515 = vmatpush1.bf16.msra.mxu0 0
  %516 = vmatprep.subr.bf16.mxu0 0
  %517 = vmatpush1.bf16.msra.mxu0 0
  %518 = vmatprep.mubr.bf16.mxu0 0
  %519 = vmatmul.mubr.bf16.gmra.mrb[0].mxu0 %v407
  %v520 = vpop.f32.mrb[0].mxu0
  %v521 = vadd.f32 %v436, %v520
  %v522 = vpop.f32.mrb[0].mxu0
  %v523 = vpop.f32.mrb[0].mxu0
  %v524 = vadd.f32 %v436, %v523
  %v525 = vpop.f32.mrb[0].mxu0
  %526 = vmatprep.mubr.bf16.mxu0 0
  %527 = vmatmul.mubr.bf16.gmra.mrb[0].mxu0 %v408
  %v528 = vpop.f32.mrb[0].mxu0
  %v529 = vadd.f32 %v436, %v528
  %v530 = vpop.f32.mrb[0].mxu0
  %v531 = vpop.f32.mrb[0].mxu0
  %v532 = vadd.f32 %v436, %v531
  %v533 = vpop.f32.mrb[0].mxu0
  %534 = vmatprep.mubr.bf16.mxu0 0
  %535 = vmatmul.mubr.bf16.gmra.mrb[0].mxu0 %v409
  %v536 = vpop.f32.mrb[0].mxu0
  %v537 = vadd.f32 %v436, %v536
  %v538 = vpop.f32.mrb[0].mxu0
  %v539 = vpop.f32.mrb[0].mxu0
  %v540 = vadd.f32 %v436, %v539
  %v541 = vpop.f32.mrb[0].mxu0
  %542 = vmatprep.mubr.bf16.mxu0 0
  %543 = vmatmul.mubr.bf16.gmra.mrb[0].mxu0 %v410
  %v544 = vpop.f32.mrb[0].mxu0
  %v545 = vadd.f32 %v436, %v544
  %v546 = vpop.f32.mrb[0].mxu0
  %v547 = vpop.f32.mrb[0].mxu0
  %v548 = vadd.f32 %v436, %v547
  %v549 = vpop.f32.mrb[0].mxu0
  %550 = vmatprep.mubr.bf16.mxu0 0
  %551 = vmatmul.mubr.bf16.gmra.mrb[0].mxu0 %v411
  %v552 = vpop.f32.mrb[0].mxu0
  %v553 = vadd.f32 %v436, %v552
  %v554 = vpop.f32.mrb[0].mxu0
  %v555 = vpop.f32.mrb[0].mxu0
  %v556 = vadd.f32 %v436, %v555
  %v557 = vpop.f32.mrb[0].mxu0
  %558 = vmatprep.mubr.bf16.mxu0 0
  %559 = vmatmul.mubr.bf16.gmra.mrb[0].mxu0 %v412
  %v560 = vpop.f32.mrb[0].mxu0
  %v561 = vadd.f32 %v436, %v560
  %v562 = vpop.f32.mrb[0].mxu0
  %v563 = vpop.f32.mrb[0].mxu0
  %v564 = vadd.f32 %v436, %v563
  %v565 = vpop.f32.mrb[0].mxu0
  %566 = vmatprep.mubr.bf16.mxu0 0
  %567 = vmatmul.mubr.bf16.gmra.mrb[0].mxu0 %v413
  %v568 = vpop.f32.mrb[0].mxu0
  %v569 = vadd.f32 %v436, %v568
  %v570 = vpop.f32.mrb[0].mxu0
  %v571 = vpop.f32.mrb[0].mxu0
  %v572 = vadd.f32 %v436, %v571
  %v573 = vpop.f32.mrb[0].mxu0
  %574 = vmatprep.mubr.bf16.mxu0 0
  %575 = vmatmul.mubr.bf16.gmra.mrb[0].mxu0 %v414
  %v576 = vpop.f32.mrb[0].mxu0
  %v577 = vadd.f32 %v436, %v576
  %v578 = vpop.f32.mrb[0].mxu0
  %v579 = vpop.f32.mrb[0].mxu0
  %v580 = vadd.f32 %v436, %v579
  %v581 = vpop.f32.mrb[0].mxu0
  %582 = vdwg.mxu0
  %v583 = vmax.f32 %v521, 0.0
  %v584 = vmax.f32 %v524, 0.0
  %v585 = vmax.f32 %v529, 0.0
  %v586 = vmax.f32 %v532, 0.0
  %v587 = vmax.f32 %v537, 0.0
  %v588 = vmax.f32 %v540, 0.0
  %v589 = vmax.f32 %v545, 0.0
  %v590 = vmax.f32 %v548, 0.0
  %v591 = vmax.f32 %v553, 0.0
  %v592 = vmax.f32 %v556, 0.0
  %v593 = vmax.f32 %v561, 0.0
  %v594 = vmax.f32 %v564, 0.0
  %v595 = vmax.f32 %v569, 0.0
  %v596 = vmax.f32 %v572, 0.0
  %v597 = vmax.f32 %v577, 0.0
  %v598 = vmax.f32 %v580, 0.0
  %v599 = vpack.c.bf16 %v584, %v583
  %v600 = vpack.c.bf16 %v586, %v585
  %v601 = vpack.c.bf16 %v588, %v587
  %v602 = vpack.c.bf16 %v590, %v589
  %v603 = vpack.c.bf16 %v592, %v591
  %v604 = vpack.c.bf16 %v594, %v593
  %v605 = vpack.c.bf16 %v596, %v595
  %v606 = vpack.c.bf16 %v598, %v597
  %607 = vmatprep.subr.bf16.mxu0 0
  %608 = vmatpush1.bf16.msra.mxu0 %v599
  %609 = vmatprep.subr.bf16.mxu0 0
  %610 = vmatpush1.bf16.msra.mxu0 %v600
  %611 = vmatprep.subr.bf16.mxu0 0
  %612 = vmatpush1.bf16.msra.mxu0 %v601
  %613 = vmatprep.subr.bf16.mxu0 0
  %614 = vmatpush1.bf16.msra.mxu0 %v602
  %615 = vmatprep.subr.bf16.mxu0 0
  %616 = vmatpush1.bf16.msra.mxu0 %v603
  %617 = vmatprep.subr.bf16.mxu0 0
  %618 = vmatpush1.bf16.msra.mxu0 %v604
  %619 = vmatprep.subr.bf16.mxu0 0
  %620 = vmatpush1.bf16.msra.mxu0 %v605
  %621 = vmatprep.subr.bf16.mxu0 0
  %622 = vmatpush1.bf16.msra.mxu0 %v606
  %623 = vmatprep.subr.bf16.mxu0 0
  %624 = vmatpush1.bf16.msra.mxu0 0
  %625 = vmatprep.subr.bf16.mxu0 0
  %626 = vmatpush1.bf16.msra.mxu0 0
  %627 = vmatprep.subr.bf16.mxu0 0
  %628 = vmatpush1.bf16.msra.mxu0 0
  %629 = vmatprep.subr.bf16.mxu0 0
  %630 = vmatpush1.bf16.msra.mxu0 0
  %631 = vmatprep.subr.bf16.mxu0 0
  %632 = vmatpush1.bf16.msra.mxu0 0
  %633 = vmatprep.subr.bf16.mxu0 0
  %634 = vmatpush1.bf16.msra.mxu0 0
  %635 = vmatprep.subr.bf16.mxu0 0
  %636 = vmatpush1.bf16.msra.mxu0 0
  %637 = vmatprep.subr.bf16.mxu0 0
  %638 = vmatpush1.bf16.msra.mxu0 0
  %639 = vmatprep.mubr.bf16.mxu0 0
  %640 = vmatmul.mubr.bf16.gmra.mrb[0].mxu0 %v46
  %v641 = vpop.f32.mrb[0].mxu0
  %v642 = vadd.f32 0.0, %v641
  %v643 = vpop.f32.mrb[0].mxu0
  %v644 = vpop.f32.mrb[0].mxu0
  %v645 = vadd.f32 0.0, %v644
  %v646 = vpop.f32.mrb[0].mxu0
  %647 = vmatprep.mubr.bf16.mxu0 0
  %648 = vmatmul.mubr.bf16.gmra.mrb[0].mxu0 %v47
  %v649 = vpop.f32.mrb[0].mxu0
  %v650 = vadd.f32 0.0, %v649
  %v651 = vpop.f32.mrb[0].mxu0
  %v652 = vpop.f32.mrb[0].mxu0
  %v653 = vadd.f32 0.0, %v652
  %v654 = vpop.f32.mrb[0].mxu0
  %655 = vmatprep.mubr.bf16.mxu0 0
  %656 = vmatmul.mubr.bf16.gmra.mrb[0].mxu0 %v48
  %v657 = vpop.f32.mrb[0].mxu0
  %v658 = vadd.f32 0.0, %v657
  %v659 = vpop.f32.mrb[0].mxu0
  %v660 = vpop.f32.mrb[0].mxu0
  %v661 = vadd.f32 0.0, %v660
  %v662 = vpop.f32.mrb[0].mxu0
  %663 = vmatprep.mubr.bf16.mxu0 0
  %664 = vmatmul.mubr.bf16.gmra.mrb[0].mxu0 %v49
  %v665 = vpop.f32.mrb[0].mxu0
  %v666 = vadd.f32 0.0, %v665
  %v667 = vpop.f32.mrb[0].mxu0
  %v668 = vpop.f32.mrb[0].mxu0
  %v669 = vadd.f32 0.0, %v668
  %v670 = vpop.f32.mrb[0].mxu0
  %671 = vmatprep.mubr.bf16.mxu0 0
  %672 = vmatmul.mubr.bf16.gmra.mrb[0].mxu0 %v50
  %v673 = vpop.f32.mrb[0].mxu0
  %v674 = vadd.f32 0.0, %v673
  %v675 = vpop.f32.mrb[0].mxu0
  %v676 = vpop.f32.mrb[0].mxu0
  %v677 = vadd.f32 0.0, %v676
  %v678 = vpop.f32.mrb[0].mxu0
  %679 = vmatprep.mubr.bf16.mxu0 0
  %680 = vmatmul.mubr.bf16.gmra.mrb[0].mxu0 %v51
  %v681 = vpop.f32.mrb[0].mxu0
  %v682 = vadd.f32 0.0, %v681
  %v683 = vpop.f32.mrb[0].mxu0
  %v684 = vpop.f32.mrb[0].mxu0
  %v685 = vadd.f32 0.0, %v684
  %v686 = vpop.f32.mrb[0].mxu0
  %687 = vmatprep.mubr.bf16.mxu0 0
  %688 = vmatmul.mubr.bf16.gmra.mrb[0].mxu0 %v52
  %v689 = vpop.f32.mrb[0].mxu0
  %v690 = vadd.f32 0.0, %v689
  %v691 = vpop.f32.mrb[0].mxu0
  %v692 = vpop.f32.mrb[0].mxu0
  %v693 = vadd.f32 0.0, %v692
  %v694 = vpop.f32.mrb[0].mxu0
  %695 = vmatprep.mubr.bf16.mxu0 0
  %696 = vmatmul.mubr.bf16.gmra.mrb[0].mxu0 %v53
  %v697 = vpop.f32.mrb[0].mxu0
  %v698 = vadd.f32 0.0, %v697
  %v699 = vpop.f32.mrb[0].mxu0
  %v700 = vpop.f32.mrb[0].mxu0
  %v701 = vadd.f32 0.0, %v700
  %v702 = vpop.f32.mrb[0].mxu0
  %703 = vdwg.mxu0
  %v704 = vpack.c.bf16 %v645, %v642
  %v705 = vpack.c.bf16 %v653, %v650
  %v706 = vpack.c.bf16 %v661, %v658
  %v707 = vpack.c.bf16 %v669, %v666
  %v708 = vpack.c.bf16 %v677, %v674
  %v709 = vpack.c.bf16 %v685, %v682
  %v710 = vpack.c.bf16 %v693, %v690
  %v711 = vpack.c.bf16 %v701, %v698
  %v712 = vld [vmem:[%s6] sm:$0xf]
  %v713 = vld [vmem:[%s6 + $0x4] sm:$0xf]
  %v714 = vld [vmem:[%s6 + $0x8] sm:$0xf]
  %v715 = vld [vmem:[%s6 + $0xc] sm:$0xf]
  %v716 = vld [vmem:[%s6 + $0x10] sm:$0xf]
  %v717 = vld [vmem:[%s6 + $0x14] sm:$0xf]
  %v718 = vld [vmem:[%s6 + $0x18] sm:$0xf]
  %v719 = vld [vmem:[%s6 + $0x1c] sm:$0xf]
  %v720 = vld [vmem:[%s6 + $0x20] sm:$0xf]
  %v721 = vld [vmem:[%s6 + $0x24] sm:$0xf]
  %v722 = vld [vmem:[%s6 + $0x28] sm:$0xf]
  %v723 = vld [vmem:[%s6 + $0x2c] sm:$0xf]
  %v724 = vld [vmem:[%s6 + $0x30] sm:$0xf]
  %v725 = vld [vmem:[%s6 + $0x34] sm:$0xf]
  %v726 = vld [vmem:[%s6 + $0x38] sm:$0xf]
  %v727 = vld [vmem:[%s6 + $0x3c] sm:$0xf]
  %v728 = vld [vmem:[%s7] sm:$0x1]
  %v730 = vlaneseq
  %v731 = vshrl.u32 %v730, 7
  %v732 = vsub.s32 0, %v731
  %v733 = vrot.slane %v728, %v732
  %v751 = vunpack.c.l.b16 %v712
  %v752 = vunpack.c.l.b16 %v713
  %v753 = vunpack.c.l.b16 %v714
  %v754 = vunpack.c.l.b16 %v715
  %v755 = vunpack.c.l.b16 %v716
  %v756 = vunpack.c.l.b16 %v717
  %v757 = vunpack.c.l.b16 %v718
  %v758 = vunpack.c.l.b16 %v719
  %v759 = vunpack.c.l.b16 %v720
  %v760 = vunpack.c.l.b16 %v721
  %v761 = vunpack.c.l.b16 %v722
  %v762 = vunpack.c.l.b16 %v723
  %v763 = vunpack.c.l.b16 %v724
  %v764 = vunpack.c.l.b16 %v725
  %v765 = vunpack.c.l.b16 %v726
  %v766 = vunpack.c.l.b16 %v727
  %v767 = vpack.c.b16 %v752, %v751
  %v768 = vpack.c.b16 %v754, %v753
  %v769 = vpack.c.b16 %v756, %v755
  %v770 = vpack.c.b16 %v758, %v757
  %v771 = vpack.c.b16 %v760, %v759
  %v772 = vpack.c.b16 %v762, %v761
  %v773 = vpack.c.b16 %v764, %v763
  %v774 = vpack.c.b16 %v766, %v765
  %783 = vmatprep.subr.bf16.mxu0 0
  %784 = vmatpush1.bf16.msra.mxu0 %v767
  %785 = vmatprep.subr.bf16.mxu0 0
  %786 = vmatpush1.bf16.msra.mxu0 %v768
  %787 = vmatprep.subr.bf16.mxu0 0
  %788 = vmatpush1.bf16.msra.mxu0 %v769
  %789 = vmatprep.subr.bf16.mxu0 0
  %790 = vmatpush1.bf16.msra.mxu0 %v770
  %791 = vmatprep.subr.bf16.mxu0 0
  %792 = vmatpush1.bf16.msra.mxu0 %v771
  %793 = vmatprep.subr.bf16.mxu0 0
  %794 = vmatpush1.bf16.msra.mxu0 %v772
  %795 = vmatprep.subr.bf16.mxu0 0
  %796 = vmatpush1.bf16.msra.mxu0 %v773
  %797 = vmatprep.subr.bf16.mxu0 0
  %798 = vmatpush1.bf16.msra.mxu0 %v774
  %799 = vmatprep.subr.bf16.mxu0 0
  %800 = vmatpush1.bf16.msra.mxu0 0
  %801 = vmatprep.subr.bf16.mxu0 0
  %802 = vmatpush1.bf16.msra.mxu0 0
  %803 = vmatprep.subr.bf16.mxu0 0
  %804 = vmatpush1.bf16.msra.mxu0 0
  %805 = vmatprep.subr.bf16.mxu0 0
  %806 = vmatpush1.bf16.msra.mxu0 0
  %807 = vmatprep.subr.bf16.mxu0 0
  %808 = vmatpush1.bf16.msra.mxu0 0
  %809 = vmatprep.subr.bf16.mxu0 0
  %810 = vmatpush1.bf16.msra.mxu0 0
  %811 = vmatprep.subr.bf16.mxu0 0
  %812 = vmatpush1.bf16.msra.mxu0 0
  %813 = vmatprep.subr.bf16.mxu0 0
  %814 = vmatpush1.bf16.msra.mxu0 0
  %815 = vmatprep.mubr.bf16.mxu0 0
  %816 = vmatmul.mubr.bf16.gmra.mrb[0].mxu0 %v704
  %v817 = vpop.f32.mrb[0].mxu0
  %v818 = vadd.f32 %v733, %v817
  %v819 = vpop.f32.mrb[0].mxu0
  %v820 = vpop.f32.mrb[0].mxu0
  %v821 = vadd.f32 %v733, %v820
  %v822 = vpop.f32.mrb[0].mxu0
  %823 = vmatprep.mubr.bf16.mxu0 0
  %824 = vmatmul.mubr.bf16.gmra.mrb[0].mxu0 %v705
  %v825 = vpop.f32.mrb[0].mxu0
  %v826 = vadd.f32 %v733, %v825
  %v827 = vpop.f32.mrb[0].mxu0
  %v828 = vpop.f32.mrb[0].mxu0
  %v829 = vadd.f32 %v733, %v828
  %v830 = vpop.f32.mrb[0].mxu0
  %831 = vmatprep.mubr.bf16.mxu0 0
  %832 = vmatmul.mubr.bf16.gmra.mrb[0].mxu0 %v706
  %v833 = vpop.f32.mrb[0].mxu0
  %v834 = vadd.f32 %v733, %v833
  %v835 = vpop.f32.mrb[0].mxu0
  %v836 = vpop.f32.mrb[0].mxu0
  %v837 = vadd.f32 %v733, %v836
  %v838 = vpop.f32.mrb[0].mxu0
  %839 = vmatprep.mubr.bf16.mxu0 0
  %840 = vmatmul.mubr.bf16.gmra.mrb[0].mxu0 %v707
  %v841 = vpop.f32.mrb[0].mxu0
  %v842 = vadd.f32 %v733, %v841
  %v843 = vpop.f32.mrb[0].mxu0
  %v844 = vpop.f32.mrb[0].mxu0
  %v845 = vadd.f32 %v733, %v844
  %v846 = vpop.f32.mrb[0].mxu0
  %847 = vmatprep.mubr.bf16.mxu0 0
  %848 = vmatmul.mubr.bf16.gmra.mrb[0].mxu0 %v708
  %v849 = vpop.f32.mrb[0].mxu0
  %v850 = vadd.f32 %v733, %v849
  %v851 = vpop.f32.mrb[0].mxu0
  %v852 = vpop.f32.mrb[0].mxu0
  %v853 = vadd.f32 %v733, %v852
  %v854 = vpop.f32.mrb[0].mxu0
  %855 = vmatprep.mubr.bf16.mxu0 0
  %856 = vmatmul.mubr.bf16.gmra.mrb[0].mxu0 %v709
  %v857 = vpop.f32.mrb[0].mxu0
  %v858 = vadd.f32 %v733, %v857
  %v859 = vpop.f32.mrb[0].mxu0
  %v860 = vpop.f32.mrb[0].mxu0
  %v861 = vadd.f32 %v733, %v860
  %v862 = vpop.f32.mrb[0].mxu0
  %863 = vmatprep.mubr.bf16.mxu0 0
  %864 = vmatmul.mubr.bf16.gmra.mrb[0].mxu0 %v710
  %v865 = vpop.f32.mrb[0].mxu0
  %v866 = vadd.f32 %v733, %v865
  %v867 = vpop.f32.mrb[0].mxu0
  %v868 = vpop.f32.mrb[0].mxu0
  %v869 = vadd.f32 %v733, %v868
  %v870 = vpop.f32.mrb[0].mxu0
  %871 = vmatprep.mubr.bf16.mxu0 0
  %872 = vmatmul.mubr.bf16.gmra.mrb[0].mxu0 %v711
  %v873 = vpop.f32.mrb[0].mxu0
  %v874 = vadd.f32 %v733, %v873
  %v875 = vpop.f32.mrb[0].mxu0
  %v876 = vpop.f32.mrb[0].mxu0
  %v877 = vadd.f32 %v733, %v876
  %v878 = vpop.f32.mrb[0].mxu0
  %879 = vdwg.mxu0
  %v880 = vmax.f32 %v818, 0.0
  %v881 = vmax.f32 %v821, 0.0
  %v882 = vmax.f32 %v826, 0.0
  %v883 = vmax.f32 %v829, 0.0
  %v884 = vmax.f32 %v834, 0.0
  %v885 = vmax.f32 %v837, 0.0
  %v886 = vmax.f32 %v842, 0.0
  %v887 = vmax.f32 %v845, 0.0
  %v888 = vmax.f32 %v850, 0.0
  %v889 = vmax.f32 %v853, 0.0
  %v890 = vmax.f32 %v858, 0.0
  %v891 = vmax.f32 %v861, 0.0
  %v892 = vmax.f32 %v866, 0.0
  %v893 = vmax.f32 %v869, 0.0
  %v894 = vmax.f32 %v874, 0.0
  %v895 = vmax.f32 %v877, 0.0
  %v896 = vpack.c.bf16 %v881, %v880
  %v897 = vpack.c.bf16 %v883, %v882
  %v898 = vpack.c.bf16 %v885, %v884
  %v899 = vpack.c.bf16 %v887, %v886
  %v900 = vpack.c.bf16 %v889, %v888
  %v901 = vpack.c.bf16 %v891, %v890
  %v902 = vpack.c.bf16 %v893, %v892
  %v903 = vpack.c.bf16 %v895, %v894
  %v904 = vld [vmem:[%s8] sm:$0xf]
  %v905 = vld [vmem:[%s8 + $0x4] sm:$0xf]
  %v906 = vld [vmem:[%s8 + $0x8] sm:$0xf]
  %v907 = vld [vmem:[%s8 + $0xc] sm:$0xf]
  %v908 = vld [vmem:[%s8 + $0x10] sm:$0xf]
  %v909 = vld [vmem:[%s8 + $0x14] sm:$0xf]
  %v910 = vld [vmem:[%s8 + $0x18] sm:$0xf]
  %v911 = vld [vmem:[%s8 + $0x1c] sm:$0xf]
  %v912 = vld [vmem:[%s8 + $0x20] sm:$0xf]
  %v913 = vld [vmem:[%s8 + $0x24] sm:$0xf]
  %v914 = vld [vmem:[%s8 + $0x28] sm:$0xf]
  %v915 = vld [vmem:[%s8 + $0x2c] sm:$0xf]
  %v916 = vld [vmem:[%s8 + $0x30] sm:$0xf]
  %v917 = vld [vmem:[%s8 + $0x34] sm:$0xf]
  %v918 = vld [vmem:[%s8 + $0x38] sm:$0xf]
  %v919 = vld [vmem:[%s8 + $0x3c] sm:$0xf]
  %v920 = vld [vmem:[%s9] sm:$0x1]
  %v922 = vlaneseq
  %v923 = vshrl.u32 %v922, 7
  %v924 = vsub.s32 0, %v923
  %v925 = vrot.slane %v920, %v924
  %v943 = vunpack.c.l.b16 %v904
  %v944 = vunpack.c.l.b16 %v905
  %v945 = vunpack.c.l.b16 %v906
  %v946 = vunpack.c.l.b16 %v907
  %v947 = vunpack.c.l.b16 %v908
  %v948 = vunpack.c.l.b16 %v909
  %v949 = vunpack.c.l.b16 %v910
  %v950 = vunpack.c.l.b16 %v911
  %v951 = vunpack.c.l.b16 %v912
  %v952 = vunpack.c.l.b16 %v913
  %v953 = vunpack.c.l.b16 %v914
  %v954 = vunpack.c.l.b16 %v915
  %v955 = vunpack.c.l.b16 %v916
  %v956 = vunpack.c.l.b16 %v917
  %v957 = vunpack.c.l.b16 %v918
  %v958 = vunpack.c.l.b16 %v919
  %v959 = vpack.c.b16 %v944, %v943
  %v960 = vpack.c.b16 %v946, %v945
  %v961 = vpack.c.b16 %v948, %v947
  %v962 = vpack.c.b16 %v950, %v949
  %v963 = vpack.c.b16 %v952, %v951
  %v964 = vpack.c.b16 %v954, %v953
  %v965 = vpack.c.b16 %v956, %v955
  %v966 = vpack.c.b16 %v958, %v957
  %975 = vmatprep.subr.bf16.mxu0 0
  %976 = vmatpush1.bf16.msra.mxu0 %v959
  %977 = vmatprep.subr.bf16.mxu0 0
  %978 = vmatpush1.bf16.msra.mxu0 %v960
  %979 = vmatprep.subr.bf16.mxu0 0
  %980 = vmatpush1.bf16.msra.mxu0 %v961
  %981 = vmatprep.subr.bf16.mxu0 0
  %982 = vmatpush1.bf16.msra.mxu0 %v962
  %983 = vmatprep.subr.bf16.mxu0 0
  %984 = vmatpush1.bf16.msra.mxu0 %v963
  %985 = vmatprep.subr.bf16.mxu0 0
  %986 = vmatpush1.bf16.msra.mxu0 %v964
  %987 = vmatprep.subr.bf16.mxu0 0
  %988 = vmatpush1.bf16.msra.mxu0 %v965
  %989 = vmatprep.subr.bf16.mxu0 0
  %990 = vmatpush1.bf16.msra.mxu0 %v966
  %991 = vmatprep.subr.bf16.mxu0 0
  %992 = vmatpush1.bf16.msra.mxu0 0
  %993 = vmatprep.subr.bf16.mxu0 0
  %994 = vmatpush1.bf16.msra.mxu0 0
  %995 = vmatprep.subr.bf16.mxu0 0
  %996 = vmatpush1.bf16.msra.mxu0 0
  %997 = vmatprep.subr.bf16.mxu0 0
  %998 = vmatpush1.bf16.msra.mxu0 0
  %999 = vmatprep.subr.bf16.mxu0 0
  %1000 = vmatpush1.bf16.msra.mxu0 0
  %1001 = vmatprep.subr.bf16.mxu0 0
  %1002 = vmatpush1.bf16.msra.mxu0 0
  %1003 = vmatprep.subr.bf16.mxu0 0
  %1004 = vmatpush1.bf16.msra.mxu0 0
  %1005 = vmatprep.subr.bf16.mxu0 0
  %1006 = vmatpush1.bf16.msra.mxu0 0
  %1007 = vmatprep.mubr.bf16.mxu0 0
  %1008 = vmatmul.mubr.bf16.gmra.mrb[0].mxu0 %v896
  %v1009 = vpop.f32.mrb[0].mxu0
  %v1010 = vadd.f32 %v925, %v1009
  %v1011 = vpop.f32.mrb[0].mxu0
  %v1012 = vpop.f32.mrb[0].mxu0
  %v1013 = vadd.f32 %v925, %v1012
  %v1014 = vpop.f32.mrb[0].mxu0
  %1015 = vmatprep.mubr.bf16.mxu0 0
  %1016 = vmatmul.mubr.bf16.gmra.mrb[0].mxu0 %v897
  %v1017 = vpop.f32.mrb[0].mxu0
  %v1018 = vadd.f32 %v925, %v1017
  %v1019 = vpop.f32.mrb[0].mxu0
  %v1020 = vpop.f32.mrb[0].mxu0
  %v1021 = vadd.f32 %v925, %v1020
  %v1022 = vpop.f32.mrb[0].mxu0
  %1023 = vmatprep.mubr.bf16.mxu0 0
  %1024 = vmatmul.mubr.bf16.gmra.mrb[0].mxu0 %v898
  %v1025 = vpop.f32.mrb[0].mxu0
  %v1026 = vadd.f32 %v925, %v1025
  %v1027 = vpop.f32.mrb[0].mxu0
  %v1028 = vpop.f32.mrb[0].mxu0
  %v1029 = vadd.f32 %v925, %v1028
  %v1030 = vpop.f32.mrb[0].mxu0
  %1031 = vmatprep.mubr.bf16.mxu0 0
  %1032 = vmatmul.mubr.bf16.gmra.mrb[0].mxu0 %v899
  %v1033 = vpop.f32.mrb[0].mxu0
  %v1034 = vadd.f32 %v925, %v1033
  %v1035 = vpop.f32.mrb[0].mxu0
  %v1036 = vpop.f32.mrb[0].mxu0
  %v1037 = vadd.f32 %v925, %v1036
  %v1038 = vpop.f32.mrb[0].mxu0
  %1039 = vmatprep.mubr.bf16.mxu0 0
  %1040 = vmatmul.mubr.bf16.gmra.mrb[0].mxu0 %v900
  %v1041 = vpop.f32.mrb[0].mxu0
  %v1042 = vadd.f32 %v925, %v1041
  %v1043 = vpop.f32.mrb[0].mxu0
  %v1044 = vpop.f32.mrb[0].mxu0
  %v1045 = vadd.f32 %v925, %v1044
  %v1046 = vpop.f32.mrb[0].mxu0
  %1047 = vmatprep.mubr.bf16.mxu0 0
  %1048 = vmatmul.mubr.bf16.gmra.mrb[0].mxu0 %v901
  %v1049 = vpop.f32.mrb[0].mxu0
  %v1050 = vadd.f32 %v925, %v1049
  %v1051 = vpop.f32.mrb[0].mxu0
  %v1052 = vpop.f32.mrb[0].mxu0
  %v1053 = vadd.f32 %v925, %v1052
  %v1054 = vpop.f32.mrb[0].mxu0
  %1055 = vmatprep.mubr.bf16.mxu0 0
  %1056 = vmatmul.mubr.bf16.gmra.mrb[0].mxu0 %v902
  %v1057 = vpop.f32.mrb[0].mxu0
  %v1058 = vadd.f32 %v925, %v1057
  %v1059 = vpop.f32.mrb[0].mxu0
  %v1060 = vpop.f32.mrb[0].mxu0
  %v1061 = vadd.f32 %v925, %v1060
  %v1062 = vpop.f32.mrb[0].mxu0
  %1063 = vmatprep.mubr.bf16.mxu0 0
  %1064 = vmatmul.mubr.bf16.gmra.mrb[0].mxu0 %v903
  %v1065 = vpop.f32.mrb[0].mxu0
  %v1066 = vadd.f32 %v925, %v1065
  %v1067 = vpop.f32.mrb[0].mxu0
  %v1068 = vpop.f32.mrb[0].mxu0
  %v1069 = vadd.f32 %v925, %v1068
  %v1070 = vpop.f32.mrb[0].mxu0
  %1071 = vdwg.mxu0
  %v1072 = vmax.f32 %v1010, 0.0
  %v1073 = vmax.f32 %v1013, 0.0
  %v1074 = vmax.f32 %v1018, 0.0
  %v1075 = vmax.f32 %v1021, 0.0
  %v1076 = vmax.f32 %v1026, 0.0
  %v1077 = vmax.f32 %v1029, 0.0
  %v1078 = vmax.f32 %v1034, 0.0
  %v1079 = vmax.f32 %v1037, 0.0
  %v1080 = vmax.f32 %v1042, 0.0
  %v1081 = vmax.f32 %v1045, 0.0
  %v1082 = vmax.f32 %v1050, 0.0
  %v1083 = vmax.f32 %v1053, 0.0
  %v1084 = vmax.f32 %v1058, 0.0
  %v1085 = vmax.f32 %v1061, 0.0
  %v1086 = vmax.f32 %v1066, 0.0
  %v1087 = vmax.f32 %v1069, 0.0
  %v1088 = vpack.c.bf16 %v1073, %v1072
  %v1089 = vpack.c.bf16 %v1075, %v1074
  %v1090 = vpack.c.bf16 %v1077, %v1076
  %v1091 = vpack.c.bf16 %v1079, %v1078
  %v1092 = vpack.c.bf16 %v1081, %v1080
  %v1093 = vpack.c.bf16 %v1083, %v1082
  %v1094 = vpack.c.bf16 %v1085, %v1084
  %v1095 = vpack.c.bf16 %v1087, %v1086
  %v1096 = vld [vmem:[%s10] sm:$0xf]
  %v1097 = vld [vmem:[%s10 + $0x4] sm:$0xf]
  %v1098 = vld [vmem:[%s10 + $0x8] sm:$0xf]
  %v1099 = vld [vmem:[%s10 + $0xc] sm:$0xf]
  %v1100 = vld [vmem:[%s10 + $0x10] sm:$0xf]
  %v1101 = vld [vmem:[%s10 + $0x14] sm:$0xf]
  %v1102 = vld [vmem:[%s10 + $0x18] sm:$0xf]
  %v1103 = vld [vmem:[%s10 + $0x1c] sm:$0xf]
  %v1104 = vld [vmem:[%s10 + $0x20] sm:$0xf]
  %v1105 = vld [vmem:[%s10 + $0x24] sm:$0xf]
  %v1106 = vld [vmem:[%s10 + $0x28] sm:$0xf]
  %v1107 = vld [vmem:[%s10 + $0x2c] sm:$0xf]
  %v1108 = vld [vmem:[%s10 + $0x30] sm:$0xf]
  %v1109 = vld [vmem:[%s10 + $0x34] sm:$0xf]
  %v1110 = vld [vmem:[%s10 + $0x38] sm:$0xf]
  %v1111 = vld [vmem:[%s10 + $0x3c] sm:$0xf]
  %v1112 = vld [vmem:[%s11] sm:$0x1]
  %v1114 = vlaneseq
  %v1115 = vshrl.u32 %v1114, 7
  %v1116 = vsub.s32 0, %v1115
  %v1117 = vrot.slane %v1112, %v1116
  %v1135 = vunpack.c.l.b16 %v1096
  %v1136 = vunpack.c.l.b16 %v1097
  %v1137 = vunpack.c.l.b16 %v1098
  %v1138 = vunpack.c.l.b16 %v1099
  %v1139 = vunpack.c.l.b16 %v1100
  %v1140 = vunpack.c.l.b16 %v1101
  %v1141 = vunpack.c.l.b16 %v1102
  %v1142 = vunpack.c.l.b16 %v1103
  %v1143 = vunpack.c.l.b16 %v1104
  %v1144 = vunpack.c.l.b16 %v1105
  %v1145 = vunpack.c.l.b16 %v1106
  %v1146 = vunpack.c.l.b16 %v1107
  %v1147 = vunpack.c.l.b16 %v1108
  %v1148 = vunpack.c.l.b16 %v1109
  %v1149 = vunpack.c.l.b16 %v1110
  %v1150 = vunpack.c.l.b16 %v1111
  %v1151 = vpack.c.b16 %v1136, %v1135
  %v1152 = vpack.c.b16 %v1138, %v1137
  %v1153 = vpack.c.b16 %v1140, %v1139
  %v1154 = vpack.c.b16 %v1142, %v1141
  %v1155 = vpack.c.b16 %v1144, %v1143
  %v1156 = vpack.c.b16 %v1146, %v1145
  %v1157 = vpack.c.b16 %v1148, %v1147
  %v1158 = vpack.c.b16 %v1150, %v1149
  %1167 = vmatprep.subr.bf16.mxu0 0
  %1168 = vmatpush1.bf16.msra.mxu0 %v1151
  %1169 = vmatprep.subr.bf16.mxu0 0
  %1170 = vmatpush1.bf16.msra.mxu0 %v1152
  %1171 = vmatprep.subr.bf16.mxu0 0
  %1172 = vmatpush1.bf16.msra.mxu0 %v1153
  %1173 = vmatprep.subr.bf16.mxu0 0
  %1174 = vmatpush1.bf16.msra.mxu0 %v1154
  %1175 = vmatprep.subr.bf16.mxu0 0
  %1176 = vmatpush1.bf16.msra.mxu0 %v1155
  %1177 = vmatprep.subr.bf16.mxu0 0
  %1178 = vmatpush1.bf16.msra.mxu0 %v1156
  %1179 = vmatprep.subr.bf16.mxu0 0
  %1180 = vmatpush1.bf16.msra.mxu0 %v1157
  %1181 = vmatprep.subr.bf16.mxu0 0
  %1182 = vmatpush1.bf16.msra.mxu0 %v1158
  %1183 = vmatprep.subr.bf16.mxu0 0
  %1184 = vmatpush1.bf16.msra.mxu0 0
  %1185 = vmatprep.subr.bf16.mxu0 0
  %1186 = vmatpush1.bf16.msra.mxu0 0
  %1187 = vmatprep.subr.bf16.mxu0 0
  %1188 = vmatpush1.bf16.msra.mxu0 0
  %1189 = vmatprep.subr.bf16.mxu0 0
  %1190 = vmatpush1.bf16.msra.mxu0 0
  %1191 = vmatprep.subr.bf16.mxu0 0
  %1192 = vmatpush1.bf16.msra.mxu0 0
  %1193 = vmatprep.subr.bf16.mxu0 0
  %1194 = vmatpush1.bf16.msra.mxu0 0
  %1195 = vmatprep.subr.bf16.mxu0 0
  %1196 = vmatpush1.bf16.msra.mxu0 0
  %1197 = vmatprep.subr.bf16.mxu0 0
  %1198 = vmatpush1.bf16.msra.mxu0 0
  %1199 = vmatprep.mubr.bf16.mxu0 0
  %1200 = vmatmul.mubr.bf16.gmra.mrb[0].mxu0 %v1088
  %v1201 = vpop.f32.mrb[0].mxu0
  %v1202 = vadd.f32 %v1117, %v1201
  %v1203 = vpop.f32.mrb[0].mxu0
  %v1204 = vpop.f32.mrb[0].mxu0
  %v1205 = vadd.f32 %v1117, %v1204
  %v1206 = vpop.f32.mrb[0].mxu0
  %1207 = vmatprep.mubr.bf16.mxu0 0
  %1208 = vmatmul.mubr.bf16.gmra.mrb[0].mxu0 %v1089
  %v1209 = vpop.f32.mrb[0].mxu0
  %v1210 = vadd.f32 %v1117, %v1209
  %v1211 = vpop.f32.mrb[0].mxu0
  %v1212 = vpop.f32.mrb[0].mxu0
  %v1213 = vadd.f32 %v1117, %v1212
  %v1214 = vpop.f32.mrb[0].mxu0
  %1215 = vmatprep.mubr.bf16.mxu0 0
  %1216 = vmatmul.mubr.bf16.gmra.mrb[0].mxu0 %v1090
  %v1217 = vpop.f32.mrb[0].mxu0
  %v1218 = vadd.f32 %v1117, %v1217
  %v1219 = vpop.f32.mrb[0].mxu0
  %v1220 = vpop.f32.mrb[0].mxu0
  %v1221 = vadd.f32 %v1117, %v1220
  %v1222 = vpop.f32.mrb[0].mxu0
  %1223 = vmatprep.mubr.bf16.mxu0 0
  %1224 = vmatmul.mubr.bf16.gmra.mrb[0].mxu0 %v1091
  %v1225 = vpop.f32.mrb[0].mxu0
  %v1226 = vadd.f32 %v1117, %v1225
  %v1227 = vpop.f32.mrb[0].mxu0
  %v1228 = vpop.f32.mrb[0].mxu0
  %v1229 = vadd.f32 %v1117, %v1228
  %v1230 = vpop.f32.mrb[0].mxu0
  %1231 = vmatprep.mubr.bf16.mxu0 0
  %1232 = vmatmul.mubr.bf16.gmra.mrb[0].mxu0 %v1092
  %v1233 = vpop.f32.mrb[0].mxu0
  %v1234 = vadd.f32 %v1117, %v1233
  %v1235 = vpop.f32.mrb[0].mxu0
  %v1236 = vpop.f32.mrb[0].mxu0
  %v1237 = vadd.f32 %v1117, %v1236
  %v1238 = vpop.f32.mrb[0].mxu0
  %1239 = vmatprep.mubr.bf16.mxu0 0
  %1240 = vmatmul.mubr.bf16.gmra.mrb[0].mxu0 %v1093
  %v1241 = vpop.f32.mrb[0].mxu0
  %v1242 = vadd.f32 %v1117, %v1241
  %v1243 = vpop.f32.mrb[0].mxu0
  %v1244 = vpop.f32.mrb[0].mxu0
  %v1245 = vadd.f32 %v1117, %v1244
  %v1246 = vpop.f32.mrb[0].mxu0
  %1247 = vmatprep.mubr.bf16.mxu0 0
  %1248 = vmatmul.mubr.bf16.gmra.mrb[0].mxu0 %v1094
  %v1249 = vpop.f32.mrb[0].mxu0
  %v1250 = vadd.f32 %v1117, %v1249
  %v1251 = vpop.f32.mrb[0].mxu0
  %v1252 = vpop.f32.mrb[0].mxu0
  %v1253 = vadd.f32 %v1117, %v1252
  %v1254 = vpop.f32.mrb[0].mxu0
  %1255 = vmatprep.mubr.bf16.mxu0 0
  %1256 = vmatmul.mubr.bf16.gmra.mrb[0].mxu0 %v1095
  %v1257 = vpop.f32.mrb[0].mxu0
  %v1258 = vadd.f32 %v1117, %v1257
  %v1259 = vpop.f32.mrb[0].mxu0
  %v1260 = vpop.f32.mrb[0].mxu0
  %v1261 = vadd.f32 %v1117, %v1260
  %v1262 = vpop.f32.mrb[0].mxu0
  %1263 = vdwg.mxu0
  %1264 = vmax.xlane.f32.xlu0 %v1202
  %v1265 = vpop.xlane.xlu0 %1264
  %1266 = vmax.xlane.f32.xlu0 %v1205
  %v1267 = vpop.xlane.xlu0 %1266
  %1268 = vmax.xlane.f32.xlu0 %v1210
  %v1269 = vpop.xlane.xlu0 %1268
  %1270 = vmax.xlane.f32.xlu0 %v1213
  %v1271 = vpop.xlane.xlu0 %1270
  %1272 = vmax.xlane.f32.xlu0 %v1218
  %v1273 = vpop.xlane.xlu0 %1272
  %1274 = vmax.xlane.f32.xlu0 %v1221
  %v1275 = vpop.xlane.xlu0 %1274
  %1276 = vmax.xlane.f32.xlu0 %v1226
  %v1277 = vpop.xlane.xlu0 %1276
  %1278 = vmax.xlane.f32.xlu0 %v1229
  %v1279 = vpop.xlane.xlu0 %1278
  %1280 = vmax.xlane.f32.xlu0 %v1234
  %v1281 = vpop.xlane.xlu0 %1280
  %1282 = vmax.xlane.f32.xlu0 %v1237
  %v1283 = vpop.xlane.xlu0 %1282
  %1284 = vmax.xlane.f32.xlu0 %v1242
  %v1285 = vpop.xlane.xlu0 %1284
  %1286 = vmax.xlane.f32.xlu0 %v1245
  %v1287 = vpop.xlane.xlu0 %1286
  %1288 = vmax.xlane.f32.xlu0 %v1250
  %v1289 = vpop.xlane.xlu0 %1288
  %1290 = vmax.xlane.f32.xlu0 %v1253
  %v1291 = vpop.xlane.xlu0 %1290
  %1292 = vmax.xlane.f32.xlu0 %v1258
  %v1293 = vpop.xlane.xlu0 %1292
  %1294 = vmax.xlane.f32.xlu0 %v1261
  %v1295 = vpop.xlane.xlu0 %1294
  %v1296 = vsub.f32 %v1202, %v1265
  %v1297 = vsub.f32 %v1205, %v1267
  %v1298 = vsub.f32 %v1210, %v1269
  %v1299 = vsub.f32 %v1213, %v1271
  %v1300 = vsub.f32 %v1218, %v1273
  %v1301 = vsub.f32 %v1221, %v1275
  %v1302 = vsub.f32 %v1226, %v1277
  %v1303 = vsub.f32 %v1229, %v1279
  %v1304 = vsub.f32 %v1234, %v1281
  %v1305 = vsub.f32 %v1237, %v1283
  %v1306 = vsub.f32 %v1242, %v1285
  %v1307 = vsub.f32 %v1245, %v1287
  %v1308 = vsub.f32 %v1250, %v1289
  %v1309 = vsub.f32 %v1253, %v1291
  %v1310 = vsub.f32 %v1258, %v1293
  %v1311 = vsub.f32 %v1261, %v1295
  %v1312 = vmul.f32 %v1296, 1.442695
  %v1313 = vpow.pop %v1312
  %v1314 = vmul.f32 %v1297, 1.442695
  %v1315 = vpow.pop %v1314
  %v1316 = vmul.f32 %v1298, 1.442695
  %v1317 = vpow.pop %v1316
  %v1318 = vmul.f32 %v1299, 1.442695
  %v1319 = vpow.pop %v1318
  %v1320 = vmul.f32 %v1300, 1.442695
  %v1321 = vpow.pop %v1320
  %v1322 = vmul.f32 %v1301, 1.442695
  %v1323 = vpow.pop %v1322
  %v1324 = vmul.f32 %v1302, 1.442695
  %v1325 = vpow.pop %v1324
  %v1326 = vmul.f32 %v1303, 1.442695
  %v1327 = vpow.pop %v1326
  %v1328 = vmul.f32 %v1304, 1.442695
  %v1329 = vpow.pop %v1328
  %v1330 = vmul.f32 %v1305, 1.442695
  %v1331 = vpow.pop %v1330
  %v1332 = vmul.f32 %v1306, 1.442695
  %v1333 = vpow.pop %v1332
  %v1334 = vmul.f32 %v1307, 1.442695
  %v1335 = vpow.pop %v1334
  %v1336 = vmul.f32 %v1308, 1.442695
  %v1337 = vpow.pop %v1336
  %v1338 = vmul.f32 %v1309, 1.442695
  %v1339 = vpow.pop %v1338
  %v1340 = vmul.f32 %v1310, 1.442695
  %v1341 = vpow.pop %v1340
  %v1342 = vmul.f32 %v1311, 1.442695
  %v1343 = vpow.pop %v1342
  %1344 = vadd.xlane.f32.xlu0 %v1313
  %v1345 = vpop.xlane.xlu0 %1344
  %1346 = vadd.xlane.f32.xlu0 %v1315
  %v1347 = vpop.xlane.xlu0 %1346
  %1348 = vadd.xlane.f32.xlu0 %v1317
  %v1349 = vpop.xlane.xlu0 %1348
  %1350 = vadd.xlane.f32.xlu0 %v1319
  %v1351 = vpop.xlane.xlu0 %1350
  %1352 = vadd.xlane.f32.xlu0 %v1321
  %v1353 = vpop.xlane.xlu0 %1352
  %1354 = vadd.xlane.f32.xlu0 %v1323
  %v1355 = vpop.xlane.xlu0 %1354
  %1356 = vadd.xlane.f32.xlu0 %v1325
  %v1357 = vpop.xlane.xlu0 %1356
  %1358 = vadd.xlane.f32.xlu0 %v1327
  %v1359 = vpop.xlane.xlu0 %1358
  %1360 = vadd.xlane.f32.xlu0 %v1329
  %v1361 = vpop.xlane.xlu0 %1360
  %1362 = vadd.xlane.f32.xlu0 %v1331
  %v1363 = vpop.xlane.xlu0 %1362
  %1364 = vadd.xlane.f32.xlu0 %v1333
  %v1365 = vpop.xlane.xlu0 %1364
  %1366 = vadd.xlane.f32.xlu0 %v1335
  %v1367 = vpop.xlane.xlu0 %1366
  %1368 = vadd.xlane.f32.xlu0 %v1337
  %v1369 = vpop.xlane.xlu0 %1368
  %1370 = vadd.xlane.f32.xlu0 %v1339
  %v1371 = vpop.xlane.xlu0 %1370
  %1372 = vadd.xlane.f32.xlu0 %v1341
  %v1373 = vpop.xlane.xlu0 %1372
  %1374 = vadd.xlane.f32.xlu0 %v1343
  %v1375 = vpop.xlane.xlu0 %1374
  %v1376 = vlog2.pop %v1345
  %v1377 = vmul.f32 %v1376, 0.6931472
  %v1378 = vlog2.pop %v1347
  %v1379 = vmul.f32 %v1378, 0.6931472
  %v1380 = vlog2.pop %v1349
  %v1381 = vmul.f32 %v1380, 0.6931472
  %v1382 = vlog2.pop %v1351
  %v1383 = vmul.f32 %v1382, 0.6931472
  %v1384 = vlog2.pop %v1353
  %v1385 = vmul.f32 %v1384, 0.6931472
  %v1386 = vlog2.pop %v1355
  %v1387 = vmul.f32 %v1386, 0.6931472
  %v1388 = vlog2.pop %v1357
  %v1389 = vmul.f32 %v1388, 0.6931472
  %v1390 = vlog2.pop %v1359
  %v1391 = vmul.f32 %v1390, 0.6931472
  %v1392 = vlog2.pop %v1361
  %v1393 = vmul.f32 %v1392, 0.6931472
  %v1394 = vlog2.pop %v1363
  %v1395 = vmul.f32 %v1394, 0.6931472
  %v1396 = vlog2.pop %v1365
  %v1397 = vmul.f32 %v1396, 0.6931472
  %v1398 = vlog2.pop %v1367
  %v1399 = vmul.f32 %v1398, 0.6931472
  %v1400 = vlog2.pop %v1369
  %v1401 = vmul.f32 %v1400, 0.6931472
  %v1402 = vlog2.pop %v1371
  %v1403 = vmul.f32 %v1402, 0.6931472
  %v1404 = vlog2.pop %v1373
  %v1405 = vmul.f32 %v1404, 0.6931472
  %v1406 = vlog2.pop %v1375
  %v1407 = vmul.f32 %v1406, 0.6931472
  %v1408 = vsub.f32 %v1296, %v1377
  %v1409 = vsub.f32 %v1297, %v1379
  %v1410 = vsub.f32 %v1298, %v1381
  %v1411 = vsub.f32 %v1299, %v1383
  %v1412 = vsub.f32 %v1300, %v1385
  %v1413 = vsub.f32 %v1301, %v1387
  %v1414 = vsub.f32 %v1302, %v1389
  %v1415 = vsub.f32 %v1303, %v1391
  %v1416 = vsub.f32 %v1304, %v1393
  %v1417 = vsub.f32 %v1305, %v1395
  %v1418 = vsub.f32 %v1306, %v1397
  %v1419 = vsub.f32 %v1307, %v1399
  %v1420 = vsub.f32 %v1308, %v1401
  %v1421 = vsub.f32 %v1309, %v1403
  %v1422 = vsub.f32 %v1310, %v1405
  %v1423 = vsub.f32 %v1311, %v1407
  %1424 = vst [vmem:[%s12] sm:$0xff] %v1408
  %1425 = vst [vmem:[%s12 + $0x8] sm:$0xff] %v1409
  %1426 = vst [vmem:[%s12 + $0x10] sm:$0xff] %v1410
  %1427 = vst [vmem:[%s12 + $0x18] sm:$0xff] %v1411
  %1428 = vst [vmem:[%s12 + $0x20] sm:$0xff] %v1412
  %1429 = vst [vmem:[%s12 + $0x28] sm:$0xff] %v1413
  %1430 = vst [vmem:[%s12 + $0x30] sm:$0xff] %v1414
  %1431 = vst [vmem:[%s12 + $0x38] sm:$0xff] %v1415
  %1432 = vst [vmem:[%s12 + $0x40] sm:$0xff] %v1416
  %1433 = vst [vmem:[%s12 + $0x48] sm:$0xff] %v1417
  %1434 = vst [vmem:[%s12 + $0x50] sm:$0xff] %v1418
  %1435 = vst [vmem:[%s12 + $0x58] sm:$0xff] %v1419
  %1436 = vst [vmem:[%s12 + $0x60] sm:$0xff] %v1420
  %1437 = vst [vmem:[%s12 + $0x68] sm:$0xff] %v1421
  %1438 = vst [vmem:[%s12 + $0x70] sm:$0xff] %v1422
  %1439 = vst [vmem:[%s12 + $0x78] sm:$0xff] %v1423
  // Predicated region
  $region50: #{gin_forward.1} parent=0 // pred_check
    _
  $region51: #{gin_forward.1} parent=0 // pred_check_branch
    %1441 = sbr.rel (0) target = $region53
  $region52: #{gin_forward.1} parent=0 // pred_region
    _
  $region53: #{gin_forward.1} parent=0 // pred_fallthru
    _
  // Predicated region
  $region54: #{gin_forward.1} parent=0 // pred_check
    _
  $region55: #{gin_forward.1} parent=0 // pred_check_branch
    %1443 = sbr.rel (0) target = $region57
  $region56: #{gin_forward.1} parent=0 // pred_region
    _
  $region57: #{gin_forward.1} parent=0 // pred_fallthru
    _

</llo_original>
